<compile_context>
chip_gen: v7x
topology: tpu7x:2x2x1
jax: 0.10.0
libtpu: 0.0.40
codegen_flags: <defaults>
</compile_context>

<pallas_src>
import functools
import math

import jax
import jax.numpy as jnp
from jax.experimental import pallas as pl
from jax.experimental.pallas import tpu as pltpu


# ----------------------------------------------------------------------------
# Pallas kernels
# ----------------------------------------------------------------------------
def _matmul_bias_act_kernel(x_ref, w_ref, b_ref, o_ref, *, relu):
    acc = jnp.dot(x_ref[...], w_ref[...], preferred_element_type=jnp.float32)
    acc = acc + b_ref[...]
    if relu:
        acc = jnp.maximum(acc, 0.0)
    o_ref[...] = acc.astype(o_ref.dtype)


def _round_up(x, m):
    return ((x + m - 1) // m) * m


def _pick_tm(M, K):
    """Row tile targeting ~2 MiB of bf16 patches per step (256-granular)."""
    tm = (2 * 1024 * 1024) // max(2 * K, 1)
    tm = max(256, min(2048, (tm // 256) * 256))
    return min(tm, M)          # min(.) == M  ->  full-dim block (always legal)


def pallas_matmul_bias(x, w, b, relu=False):
    """x:(M,K) @ w:(K,N) + b (+ReLU). bf16 MXU operands, f32 accumulation.

    Tiled over M only; weights/bias are VMEM-resident (constant index_map),
    patch rows stream double-buffered.  M axis "parallel" for 2-TC chips.
    """
    M, K = x.shape
    K2, N = w.shape
    assert K == K2
    x = x.astype(jnp.bfloat16)
    w = w.astype(jnp.bfloat16)
    b = b.astype(jnp.float32).reshape(1, N)

    tm = _pick_tm(M, K)
    grid_m = pl.cdiv(M, tm)
    return pl.pallas_call(
        functools.partial(_matmul_bias_act_kernel, relu=relu),
        out_shape=jax.ShapeDtypeStruct((M, N), jnp.float32),
        grid=(grid_m,),
        in_specs=[
            pl.BlockSpec((tm, K), lambda m: (m, 0)),
            pl.BlockSpec((K, N), lambda m: (0, 0)),   # resident weights
            pl.BlockSpec((1, N), lambda m: (0, 0)),   # resident bias
        ],
        out_specs=pl.BlockSpec((tm, N), lambda m: (m, 0)),
        compiler_params=pltpu.CompilerParams(
            dimension_semantics=("parallel",),
            vmem_limit_bytes=32 * 1024 * 1024,
        ),
    )(x, w, b)


def _bbox_overlaps_kernel(prop_ref, gt_ref, out_ref):
    """prop_ref: (1,4,tn) lane-dense proposals, gt_ref: (1,K,5), out: (1,K,tn)."""
    prop = prop_ref[0]                        # (4, tn)
    gt = gt_ref[0]                            # (K, 5)

    px1 = prop[0:1, :]
    py1 = prop[1:2, :]
    px2 = prop[2:3, :]
    py2 = prop[3:4, :]                        # (1, tn) lane rows

    gx1 = gt[:, 0:1]
    gy1 = gt[:, 1:2]
    gx2 = gt[:, 2:3]
    gy2 = gt[:, 3:4]                          # (K, 1) sublane columns

    gt_w = gx2 - gx1 + 1.0
    gt_h = gy2 - gy1 + 1.0
    gt_area = gt_w * gt_h                     # (K, 1)

    p_w = px2 - px1 + 1.0
    p_h = py2 - py1 + 1.0
    p_area = p_w * p_h                        # (1, tn)

    gt_zero = (gt_w == 1.0) & (gt_h == 1.0)   # (K, 1)
    p_zero = (p_w == 1.0) & (p_h == 1.0)      # (1, tn)

    iw = jnp.maximum(jnp.minimum(px2, gx2) - jnp.maximum(px1, gx1) + 1.0, 0.0)
    ih = jnp.maximum(jnp.minimum(py2, gy2) - jnp.maximum(py1, gy1) + 1.0, 0.0)
    inter = iw * ih                           # (K, tn)
    ua = p_area + gt_area - inter             # >= 1 by the +1 area convention
    ov = inter * pl.reciprocal(ua, approx=True)   # divide on the EUP slot

    # implicit broadcasting; no materialized broadcast_to masks
    ov = jnp.where(gt_zero, 0.0, ov)
    ov = jnp.where(p_zero, -1.0, ov)
    out_ref[0] = ov.astype(out_ref.dtype)


def bbox_overlaps_batch_pallas(proposals, gt_boxes, tn=512):
    """proposals: (B, N, 4), gt_boxes: (B, K, 5) -> (B, N, K).

    Kernel layout puts N (proposals) on the lane axis: input (B, 4, N_pad),
    output (B, K, N_pad) with lane-dense stores; tiled over N, grid (B, N/tn).
    """
    B, N, _ = proposals.shape
    K = gt_boxes.shape[1]
    tn = min(tn, _round_up(N, 128))
    N_pad = _round_up(N, tn)

    prop_t = jnp.transpose(proposals.astype(jnp.float32), (0, 2, 1))  # (B,4,N)
    prop_t = jnp.pad(prop_t, ((0, 0), (0, 0), (0, N_pad - N)))        # zero pad -> masked -1, sliced off
    gt = gt_boxes.astype(jnp.float32)                                 # (B,K,5)

    out = pl.pallas_call(
        _bbox_overlaps_kernel,
        out_shape=jax.ShapeDtypeStruct((B, K, N_pad), jnp.float32),
        grid=(B, N_pad // tn),
        in_specs=[
            pl.BlockSpec((1, 4, tn), lambda b, n: (b, 0, n)),
            pl.BlockSpec((1, K, 5), lambda b, n: (b, 0, 0)),   # per-batch gt stays resident
        ],
        out_specs=pl.BlockSpec((1, K, tn), lambda b, n: (b, 0, n)),
        compiler_params=pltpu.CompilerParams(
            dimension_semantics=("parallel", "parallel"),
            vmem_limit_bytes=32 * 1024 * 1024,
        ),
    )(prop_t, gt)
    # (B, K, N) -> (B, N, K) to match the reference layout
    return jnp.transpose(out[:, :, :N], (0, 2, 1))


# ----------------------------------------------------------------------------
# Glue: im2col conv, pooling, anchors, box transforms
# ----------------------------------------------------------------------------
def conv2d_pallas(x_nhwc, w_flat, b, relu=True, ksize=3):
    """Same-padded conv, stride 1. w_flat: (ksize*ksize*Cin, Cout).

    # TODO(synk): replace the XLA-materialized im2col (ksize^2 x activation
    # bytes through HBM) with an in-kernel tap-shifted accumulation; patches
    # are built in bf16 here to halve that traffic in the meantime.
    """
    B, H, W, C = x_nhwc.shape
    x_bf16 = x_nhwc.astype(jnp.bfloat16)
    if ksize == 1:
        patches = x_bf16.reshape(B * H * W, C)
    else:
        pad = ksize // 2
        xp = jnp.pad(x_bf16, ((0, 0), (pad, pad), (pad, pad), (0, 0)))
        cols = []
        for dy in range(ksize):
            for dx in range(ksize):
                cols.append(xp[:, dy:dy + H, dx:dx + W, :])
        patches = jnp.concatenate(cols, axis=-1).reshape(B * H * W, ksize * ksize * C)
    out = pallas_matmul_bias(patches, w_flat, b, relu=relu)
    return out.reshape(B, H, W, w_flat.shape[1])


def maxpool2(x):
    # TODO(synk): fuse the 2x2 maxpool into the conv-matmul output stage to
    # cut conv-output HBM writeback; kept as XLA glue for now.
    B, H, W, C = x.shape
    return x.reshape(B, H // 2, 2, W // 2, 2, C).max(axis=(2, 4))


def generate_base_anchors(base_size=16, ratios=(0.5, 1.0, 2.0), scales=(8, 16, 32)):
    w = h = float(base_size)
    x_ctr = (w - 1.0) * 0.5
    y_ctr = (h - 1.0) * 0.5
    size = w * h
    anchors = []
    for r in ratios:
        ws = round(math.sqrt(size / r))
        hs = round(ws * r)
        for s in scales:
            wss = ws * s
            hss = hs * s
            anchors.append([x_ctr - 0.5 * (wss - 1), y_ctr - 0.5 * (hss - 1),
                            x_ctr + 0.5 * (wss - 1), y_ctr + 0.5 * (hss - 1)])
    return jnp.array(anchors, dtype=jnp.float32)  # (9, 4)


def shifted_anchors(Hf, Wf, feat_stride):
    base = generate_base_anchors()
    sx = jnp.arange(Wf, dtype=jnp.float32) * feat_stride
    sy = jnp.arange(Hf, dtype=jnp.float32) * feat_stride
    SY, SX = jnp.meshgrid(sy, sx, indexing="ij")
    shifts = jnp.stack([SX.ravel(), SY.ravel(), SX.ravel(), SY.ravel()], axis=1)
    all_anchors = shifts[:, None, :] + base[None, :, :]   # (Hf*Wf, A, 4)
    return all_anchors.reshape(-1, 4)


BBOX_XFORM_CLIP = math.log(1000.0 / 16.0)


def bbox_transform_inv(anchors, deltas):
    widths = anchors[:, 2] - anchors[:, 0] + 1.0
    heights = anchors[:, 3] - anchors[:, 1] + 1.0
    ctr_x = anchors[:, 0] + 0.5 * widths
    ctr_y = anchors[:, 1] + 0.5 * heights
    dx, dy = deltas[..., 0], deltas[..., 1]
    # clamp dw/dh (Faster-RCNN style) so exp() cannot overflow with untrained weights
    dw = jnp.minimum(deltas[..., 2], BBOX_XFORM_CLIP)
    dh = jnp.minimum(deltas[..., 3], BBOX_XFORM_CLIP)
    pred_ctr_x = dx * widths + ctr_x
    pred_ctr_y = dy * heights + ctr_y
    pred_w = jnp.exp(dw) * widths
    pred_h = jnp.exp(dh) * heights
    return jnp.stack([pred_ctr_x - 0.5 * pred_w, pred_ctr_y - 0.5 * pred_h,
                      pred_ctr_x + 0.5 * pred_w, pred_ctr_y + 0.5 * pred_h], axis=-1)


def clip_boxes(boxes, im_size):
    H, W = im_size
    return jnp.stack([jnp.clip(boxes[..., 0], 0.0, W - 1.0),
                      jnp.clip(boxes[..., 1], 0.0, H - 1.0),
                      jnp.clip(boxes[..., 2], 0.0, W - 1.0),
                      jnp.clip(boxes[..., 3], 0.0, H - 1.0)], axis=-1)


# ----------------------------------------------------------------------------
# SimpleDet forward
# ----------------------------------------------------------------------------
NUM_ANCHORS = 9


def init_params(key):
    ks = jax.random.split(key, 7)

    def w(k, shape, scale=0.05):
        return jax.random.normal(k, shape, dtype=jnp.float32) * scale

    p = {
        # VGG_conv(3) stand-in: 3 -> 32 -> 64 -> 128 -> 256, maxpool x4 (stride 16)
        "c1_w": w(ks[0], (3 * 3 * 3, 32)),    "c1_b": jnp.zeros((32,), jnp.float32),
        "c2_w": w(ks[1], (3 * 3 * 32, 64)),   "c2_b": jnp.zeros((64,), jnp.float32),
        "c3_w": w(ks[2], (3 * 3 * 64, 128)),  "c3_b": jnp.zeros((128,), jnp.float32),
        "c4_w": w(ks[3], (3 * 3 * 128, 256)), "c4_b": jnp.zeros((256,), jnp.float32),
        # RPN(256) stand-in
        "rpn_w": w(ks[4], (3 * 3 * 256, 256)), "rpn_b": jnp.zeros((256,), jnp.float32),
        "cls_w": w(ks[5], (256, 2 * NUM_ANCHORS)), "cls_b": jnp.zeros((2 * NUM_ANCHORS,), jnp.float32),
        "bbox_w": w(ks[6], (256, 4 * NUM_ANCHORS), scale=0.01),
        "bbox_b": jnp.zeros((4 * NUM_ANCHORS,), jnp.float32),
    }
    return p


def simple_det_forward(params, image_nchw, gt_boxes, feat_stride=16):
    # layout: input is NCHW (PyTorch convention); convert to NHWC for the
    # im2col + Pallas-matmul conv path.
    x = jnp.transpose(image_nchw, (0, 2, 3, 1)).astype(jnp.float32)

    # --- VGG_conv(3) (synthetic stand-in; original class not provided) ---
    x = maxpool2(conv2d_pallas(x, params["c1_w"], params["c1_b"]))
    x = maxpool2(conv2d_pallas(x, params["c2_w"], params["c2_b"]))
    x = maxpool2(conv2d_pallas(x, params["c3_w"], params["c3_b"]))
    base_feat = maxpool2(conv2d_pallas(x, params["c4_w"], params["c4_b"]))

    im_size = (image_nchw.shape[2], image_nchw.shape[3])

    # --- RPN(256) (synthetic stand-in; original class not provided) ---
    rpn_feat = conv2d_pallas(base_feat, params["rpn_w"], params["rpn_b"])
    B, Hf, Wf, _ = rpn_feat.shape

    # fused 1x1 cls + bbox heads: single matmul over the shared rpn_feat read
    head_w = jnp.concatenate([params["cls_w"], params["bbox_w"]], axis=1)   # (256, 54)
    head_b = jnp.concatenate([params["cls_b"], params["bbox_b"]], axis=0)   # (54,)
    head = conv2d_pallas(rpn_feat, head_w, head_b, relu=False, ksize=1)
    cls = head[..., : 2 * NUM_ANCHORS]
    bbox = head[..., 2 * NUM_ANCHORS:]

    cls = cls.reshape(B, Hf * Wf * NUM_ANCHORS, 2)
    cls_prob = jax.nn.softmax(cls, axis=-1)
    bbox_scores_ = cls_prob[:, :, 1]
    deltas = bbox.reshape(B, Hf * Wf * NUM_ANCHORS, 4)

    anchors = shifted_anchors(Hf, Wf, feat_stride)                          # (N, 4)
    proposals = clip_boxes(bbox_transform_inv(anchors, deltas), im_size)    # (B, N, 4)
    output = cls_prob

    # --- bbox_overlaps_batch: Pallas IoU kernel (the defined hot path) ---
    cls_overlaps = bbox_overlaps_batch_pallas(proposals, gt_boxes)
    return output, bbox_scores_, proposals, cls_overlaps


# pure-JAX reference of bbox_overlaps_batch (for correctness check only)
def bbox_overlaps_batch_ref(proposals, gt_boxes):
    gt = gt_boxes[:, :, :4]
    gt_x = gt[:, :, 2] - gt[:, :, 0] + 1.0
    gt_y = gt[:, :, 3] - gt[:, :, 1] + 1.0
    gt_area = (gt_x * gt_y)[:, None, :]
    px = proposals[:, :, 2] - proposals[:, :, 0] + 1.0
    py = proposals[:, :, 3] - proposals[:, :, 1] + 1.0
    p_area = (px * py)[:, :, None]
    iw = (jnp.minimum(proposals[:, :, None, 2], gt[:, None, :, 2]) -
          jnp.maximum(proposals[:, :, None, 0], gt[:, None, :, 0]) + 1.0)
    iw = jnp.maximum(iw, 0.0)
    ih = (jnp.minimum(proposals[:, :, None, 3], gt[:, None, :, 3]) -
          jnp.maximum(proposals[:, :, None, 1], gt[:, None, :, 1]) + 1.0)
    ih = jnp.maximum(ih, 0.0)
    ua = p_area + gt_area - iw * ih
    ov = iw * ih / ua
    ov = jnp.where(((gt_x == 1.0) & (gt_y == 1.0))[:, None, :], 0.0, ov)
    ov = jnp.where(((px == 1.0) & (py == 1.0))[:, :, None], -1.0, ov)
    return ov


if __name__ == "__main__":
    key = jax.random.PRNGKey(0)
    k_img, k_gt, k_par = jax.random.split(key, 3)

    B, C, H, W = 2, 3, 32, 32
    feat_stride = 16
    Hf, Wf = H // feat_stride, W // feat_stride
    N = Hf * Wf * NUM_ANCHORS        # 36 anchors/proposals per image
    K = N                            # gt count = N (matches reference's view semantics)

    image = jax.random.normal(k_img, (B, C, H, W), dtype=jnp.float32)

    kx, ky, kw, kh = jax.random.split(k_gt, 4)
    gx1 = jax.random.uniform(kx, (B, K), minval=0.0, maxval=16.0)
    gy1 = jax.random.uniform(ky, (B, K), minval=0.0, maxval=16.0)
    gw = jax.random.uniform(kw, (B, K), minval=1.0, maxval=14.0)
    gh = jax.random.uniform(kh, (B, K), minval=1.0, maxval=14.0)
    gt_boxes = jnp.stack([gx1, gy1,
                          jnp.minimum(gx1 + gw, W - 1.0),
                          jnp.minimum(gy1 + gh, H - 1.0),
                          jnp.ones((B, K), jnp.float32)], axis=-1)  # (B, K, 5)

    params = init_params(k_par)

    output, bbox_scores_, proposals, cls_overlaps = simple_det_forward(
        params, image, gt_boxes, feat_stride=feat_stride)
    cls_overlaps = jax.block_until_ready(cls_overlaps)

    # sanity-check the Pallas IoU kernel against a pure-JAX reference
    # (tolerance loosened from 1e-5 because the kernel uses the approximate
    #  EUP reciprocal; IoU magnitudes are <= 1 so atol dominates)
    ref = bbox_overlaps_batch_ref(proposals, gt_boxes)
    assert cls_overlaps.shape == (B, N, K)
    assert jnp.allclose(cls_overlaps, ref, atol=5e-3, rtol=5e-3)
    assert bool(jnp.all(jnp.isfinite(proposals)))

    print("KERNEL_OK")
</pallas_src>

<mosaic_0001>
module attributes {stable_mosaic.version = 11 : i64} {
  func.func @_matmul_bias_act_kernel(%arg0: i32, %arg1: memref<2048x27xbf16, #tpu.memory_space<vmem>>, %arg2: memref<27x32xbf16, #tpu.memory_space<vmem>>, %arg3: memref<1x32xf32, #tpu.memory_space<vmem>>, %arg4: memref<2048x32xf32, #tpu.memory_space<vmem>>) attributes {dimension_semantics = [#tpu.dimension_semantics<parallel>], iteration_bounds = array<i64: 1>, scalar_prefetch = 0 : i64, scratch_operands = 0 : i64, tpu.core_type = #tpu.core_type<tc>, window_params = [{transform_indices = @transform_0, window_bounds = array<i64: 2048, 27>}, {pipeline_mode = #tpu.pipeline_mode<synchronous>, transform_indices = @transform_1, window_bounds = array<i64: 27, 32>}, {pipeline_mode = #tpu.pipeline_mode<synchronous>, transform_indices = @transform_2, window_bounds = array<i64: 1, 32>}, {transform_indices = @transform_3, window_bounds = array<i64: 2048, 32>}]} {
    %c0 = arith.constant 0 : index
    %c0_0 = arith.constant 0 : index
    %0 = vector.load %arg1[%c0, %c0_0] : memref<2048x27xbf16, #tpu.memory_space<vmem>>, vector<2048x27xbf16>
    %c0_1 = arith.constant 0 : index
    %c0_2 = arith.constant 0 : index
    %1 = vector.load %arg2[%c0_1, %c0_2] : memref<27x32xbf16, #tpu.memory_space<vmem>>, vector<27x32xbf16>
    %cst = arith.constant dense<0.000000e+00> : vector<2048x32xf32>
    %2 = tpu.matmul %0, %1, %cst {dimension_numbers = #tpu.dot_dimension_numbers<[1], [0], [0], [1], [0, 0, 1, 1], [], []>} : vector<2048x27xbf16>, vector<27x32xbf16>, vector<2048x32xf32> -> vector<2048x32xf32>
    %c0_3 = arith.constant 0 : index
    %c0_4 = arith.constant 0 : index
    %3 = vector.load %arg3[%c0_3, %c0_4] : memref<1x32xf32, #tpu.memory_space<vmem>>, vector<1x32xf32>
    %4 = vector.broadcast %3 : vector<1x32xf32> to vector<2048x32xf32>
    %5 = arith.addf %2, %4 : vector<2048x32xf32>
    %cst_5 = arith.constant 0.000000e+00 : f32
    %6 = vector.broadcast %cst_5 : f32 to vector<2048x32xf32>
    %7 = arith.maximumf %5, %6 : vector<2048x32xf32>
    %c0_6 = arith.constant 0 : index
    %c0_7 = arith.constant 0 : index
    %8 = vector.load %arg4[%c0_6, %c0_7] : memref<2048x32xf32, #tpu.memory_space<vmem>>, vector<2048x32xf32>
    tpu.vector_store %arg4[%c0_6, %c0_7], %7 {strides = array<i32>} : memref<2048x32xf32, #tpu.memory_space<vmem>>, vector<2048x32xf32>,
    return
  }
  func.func @transform_0(%arg0: i32) -> (i32, i32) {
    %c0_i32 = arith.constant 0 : i32
    %c0_i32_0 = arith.constant 0 : i32
    return %arg0, %c0_i32 : i32, i32
  }
  func.func @transform_1(%arg0: i32) -> (i32, i32) {
    %c0_i32 = arith.constant 0 : i32
    %c0_i32_0 = arith.constant 0 : i32
    %c0_i32_1 = arith.constant 0 : i32
    return %c0_i32, %c0_i32_0 : i32, i32
  }
  func.func @transform_2(%arg0: i32) -> (i32, i32) {
    %c0_i32 = arith.constant 0 : i32
    %c0_i32_0 = arith.constant 0 : i32
    %c0_i32_1 = arith.constant 0 : i32
    return %c0_i32, %c0_i32_0 : i32, i32
  }
  func.func @transform_3(%arg0: i32) -> (i32, i32) {
    %c0_i32 = arith.constant 0 : i32
    %c0_i32_0 = arith.constant 0 : i32
    return %arg0, %c0_i32 : i32, i32
  }
}

</mosaic_0001>

<llo_original>
// kernel: tpu_custom_call.1
$region0: #{tpu_custom_call.1}
  #allocation0 [shape = 'u32[]', space=smem, size = 0x4, offset = 0x4, fixed_abs, tag = 'smem constant byte address 0x4 - core index']
  #allocation1 [shape = 'u32[144,128]{1,0:T(1,128)}', space=vmem, size = 0x12000, scoped, tag = 'internal scratch']
  %s0 = inlined_call_operand.vmem [shape: bf16[2048,27], index: 0, kind: input, shape index: {}]
  %s1 = inlined_call_operand.vmem [shape: bf16[27,32], index: 1, kind: input, shape index: {}]
  %s2 = inlined_call_operand.vmem [shape: f32[1,32], index: 2, kind: input, shape index: {}]
  %s3 = inlined_call_operand.vmem [shape: f32[2048,32], index: 3, kind: output, shape index: {}]
  %s4 = sld [smem:[#allocation0]]
  $region22: #{tpu_custom_call.1} parent=0
    _
  %s6 = ssub.s32 1, %s4
  %s7 = scalar_select 0, %s6, %s4
  // Predicated region
  $region2: #{tpu_custom_call.1} parent=0 // pred_check
    _
  $region3: #{tpu_custom_call.1} parent=0 // pred_check_branch
    %9 = sbr.rel (0) target = $region5
  $region4: #{tpu_custom_call.1} parent=0 // pred_region
    _
  $region5: #{tpu_custom_call.1} parent=0 // pred_fallthru
    _
  // Predicated region
  $region6: #{tpu_custom_call.1} parent=0 // pred_check
    _
  $region7: #{tpu_custom_call.1} parent=0 // pred_check_branch
    %11 = sbr.rel (0) target = $region9
  $region8: #{tpu_custom_call.1} parent=0 // pred_region
    _
  $region9: #{tpu_custom_call.1} parent=0 // pred_fallthru
    _
  // Predicated region
  $region10: #{tpu_custom_call.1} parent=0 // pred_check
    _
  $region11: #{tpu_custom_call.1} parent=0 // pred_check_branch
    %13 = sbr.rel (0) target = $region13
  $region12: #{tpu_custom_call.1} parent=0 // pred_region
    _
  $region13: #{tpu_custom_call.1} parent=0 // pred_fallthru
    _
  %v15 = vld [vmem:[%s0] sm:$0xf]
  %v16 = vld [vmem:[%s0 + $0x4] sm:$0xf]
  %v17 = vld [vmem:[%s0 + $0x8] sm:$0xf]
  %v18 = vld [vmem:[%s0 + $0xc] sm:$0xf]
  %v19 = vld [vmem:[%s0 + $0x10] sm:$0xf]
  %v20 = vld [vmem:[%s0 + $0x14] sm:$0xf]
  %v21 = vld [vmem:[%s0 + $0x18] sm:$0xf]
  %v22 = vld [vmem:[%s0 + $0x1c] sm:$0xf]
  %v23 = vld [vmem:[%s0 + $0x20] sm:$0xf]
  %v24 = vld [vmem:[%s0 + $0x24] sm:$0xf]
  %v25 = vld [vmem:[%s0 + $0x28] sm:$0xf]
  %v26 = vld [vmem:[%s0 + $0x2c] sm:$0xf]
  %v27 = vld [vmem:[%s0 + $0x30] sm:$0xf]
  %v28 = vld [vmem:[%s0 + $0x34] sm:$0xf]
  %v29 = vld [vmem:[%s0 + $0x38] sm:$0xf]
  %v30 = vld [vmem:[%s0 + $0x3c] sm:$0xf]
  %v31 = vld [vmem:[%s0 + $0x40] sm:$0xf]
  %v32 = vld [vmem:[%s0 + $0x44] sm:$0xf]
  %v33 = vld [vmem:[%s0 + $0x48] sm:$0xf]
  %v34 = vld [vmem:[%s0 + $0x4c] sm:$0xf]
  %v35 = vld [vmem:[%s0 + $0x50] sm:$0xf]
  %v36 = vld [vmem:[%s0 + $0x54] sm:$0xf]
  %v37 = vld [vmem:[%s0 + $0x58] sm:$0xf]
  %v38 = vld [vmem:[%s0 + $0x5c] sm:$0xf]
  %v39 = vld [vmem:[%s0 + $0x60] sm:$0xf]
  %v40 = vld [vmem:[%s0 + $0x64] sm:$0xf]
  %v41 = vld [vmem:[%s0 + $0x68] sm:$0xf]
  %v42 = vld [vmem:[%s0 + $0x6c] sm:$0xf]
  %v43 = vld [vmem:[%s0 + $0x70] sm:$0xf]
  %v44 = vld [vmem:[%s0 + $0x74] sm:$0xf]
  %v45 = vld [vmem:[%s0 + $0x78] sm:$0xf]
  %v46 = vld [vmem:[%s0 + $0x7c] sm:$0xf]
  %v47 = vld [vmem:[%s0 + $0x80] sm:$0xf]
  %v48 = vld [vmem:[%s0 + $0x84] sm:$0xf]
  %v49 = vld [vmem:[%s0 + $0x88] sm:$0xf]
  %v50 = vld [vmem:[%s0 + $0x8c] sm:$0xf]
  %v51 = vld [vmem:[%s0 + $0x90] sm:$0xf]
  %v52 = vld [vmem:[%s0 + $0x94] sm:$0xf]
  %v53 = vld [vmem:[%s0 + $0x98] sm:$0xf]
  %v54 = vld [vmem:[%s0 + $0x9c] sm:$0xf]
  %v55 = vld [vmem:[%s0 + $0xa0] sm:$0xf]
  %v56 = vld [vmem:[%s0 + $0xa4] sm:$0xf]
  %v57 = vld [vmem:[%s0 + $0xa8] sm:$0xf]
  %v58 = vld [vmem:[%s0 + $0xac] sm:$0xf]
  %v59 = vld [vmem:[%s0 + $0xb0] sm:$0xf]
  %v60 = vld [vmem:[%s0 + $0xb4] sm:$0xf]
  %v61 = vld [vmem:[%s0 + $0xb8] sm:$0xf]
  %v62 = vld [vmem:[%s0 + $0xbc] sm:$0xf]
  %v63 = vld [vmem:[%s0 + $0xc0] sm:$0xf]
  %v64 = vld [vmem:[%s0 + $0xc4] sm:$0xf]
  %v65 = vld [vmem:[%s0 + $0xc8] sm:$0xf]
  %v66 = vld [vmem:[%s0 + $0xcc] sm:$0xf]
  %v67 = vld [vmem:[%s0 + $0xd0] sm:$0xf]
  %v68 = vld [vmem:[%s0 + $0xd4] sm:$0xf]
  %v69 = vld [vmem:[%s0 + $0xd8] sm:$0xf]
  %v70 = vld [vmem:[%s0 + $0xdc] sm:$0xf]
  %v71 = vld [vmem:[%s0 + $0xe0] sm:$0xf]
  %v72 = vld [vmem:[%s0 + $0xe4] sm:$0xf]
  %v73 = vld [vmem:[%s0 + $0xe8] sm:$0xf]
  %v74 = vld [vmem:[%s0 + $0xec] sm:$0xf]
  %v75 = vld [vmem:[%s0 + $0xf0] sm:$0xf]
  %v76 = vld [vmem:[%s0 + $0xf4] sm:$0xf]
  %v77 = vld [vmem:[%s0 + $0xf8] sm:$0xf]
  %v78 = vld [vmem:[%s0 + $0xfc] sm:$0xf]
  %v79 = vld [vmem:[%s0 + $0x100] sm:$0xf]
  %v80 = vld [vmem:[%s0 + $0x104] sm:$0xf]
  %v81 = vld [vmem:[%s0 + $0x108] sm:$0xf]
  %v82 = vld [vmem:[%s0 + $0x10c] sm:$0xf]
  %v83 = vld [vmem:[%s0 + $0x110] sm:$0xf]
  %v84 = vld [vmem:[%s0 + $0x114] sm:$0xf]
  %v85 = vld [vmem:[%s0 + $0x118] sm:$0xf]
  %v86 = vld [vmem:[%s0 + $0x11c] sm:$0xf]
  %v87 = vld [vmem:[%s0 + $0x120] sm:$0xf]
  %v88 = vld [vmem:[%s0 + $0x124] sm:$0xf]
  %v89 = vld [vmem:[%s0 + $0x128] sm:$0xf]
  %v90 = vld [vmem:[%s0 + $0x12c] sm:$0xf]
  %v91 = vld [vmem:[%s0 + $0x130] sm:$0xf]
  %v92 = vld [vmem:[%s0 + $0x134] sm:$0xf]
  %v93 = vld [vmem:[%s0 + $0x138] sm:$0xf]
  %v94 = vld [vmem:[%s0 + $0x13c] sm:$0xf]
  %v95 = vld [vmem:[%s0 + $0x140] sm:$0xf]
  %v96 = vld [vmem:[%s0 + $0x144] sm:$0xf]
  %v97 = vld [vmem:[%s0 + $0x148] sm:$0xf]
  %v98 = vld [vmem:[%s0 + $0x14c] sm:$0xf]
  %v99 = vld [vmem:[%s0 + $0x150] sm:$0xf]
  %v100 = vld [vmem:[%s0 + $0x154] sm:$0xf]
  %v101 = vld [vmem:[%s0 + $0x158] sm:$0xf]
  %v102 = vld [vmem:[%s0 + $0x15c] sm:$0xf]
  %v103 = vld [vmem:[%s0 + $0x160] sm:$0xf]
  %v104 = vld [vmem:[%s0 + $0x164] sm:$0xf]
  %v105 = vld [vmem:[%s0 + $0x168] sm:$0xf]
  %v106 = vld [vmem:[%s0 + $0x16c] sm:$0xf]
  %v107 = vld [vmem:[%s0 + $0x170] sm:$0xf]
  %v108 = vld [vmem:[%s0 + $0x174] sm:$0xf]
  %v109 = vld [vmem:[%s0 + $0x178] sm:$0xf]
  %v110 = vld [vmem:[%s0 + $0x17c] sm:$0xf]
  %v111 = vld [vmem:[%s0 + $0x180] sm:$0xf]
  %v112 = vld [vmem:[%s0 + $0x184] sm:$0xf]
  %v113 = vld [vmem:[%s0 + $0x188] sm:$0xf]
  %v114 = vld [vmem:[%s0 + $0x18c] sm:$0xf]
  %v115 = vld [vmem:[%s0 + $0x190] sm:$0xf]
  %v116 = vld [vmem:[%s0 + $0x194] sm:$0xf]
  %v117 = vld [vmem:[%s0 + $0x198] sm:$0xf]
  %v118 = vld [vmem:[%s0 + $0x19c] sm:$0xf]
  %v119 = vld [vmem:[%s0 + $0x1a0] sm:$0xf]
  %v120 = vld [vmem:[%s0 + $0x1a4] sm:$0xf]
  %v121 = vld [vmem:[%s0 + $0x1a8] sm:$0xf]
  %v122 = vld [vmem:[%s0 + $0x1ac] sm:$0xf]
  %v123 = vld [vmem:[%s0 + $0x1b0] sm:$0xf]
  %v124 = vld [vmem:[%s0 + $0x1b4] sm:$0xf]
  %v125 = vld [vmem:[%s0 + $0x1b8] sm:$0xf]
  %v126 = vld [vmem:[%s0 + $0x1bc] sm:$0xf]
  %v127 = vld [vmem:[%s0 + $0x1c0] sm:$0xf]
  %v128 = vld [vmem:[%s0 + $0x1c4] sm:$0xf]
  %v129 = vld [vmem:[%s0 + $0x1c8] sm:$0xf]
  %v130 = vld [vmem:[%s0 + $0x1cc] sm:$0xf]
  %v131 = vld [vmem:[%s0 + $0x1d0] sm:$0xf]
  %v132 = vld [vmem:[%s0 + $0x1d4] sm:$0xf]
  %v133 = vld [vmem:[%s0 + $0x1d8] sm:$0xf]
  %v134 = vld [vmem:[%s0 + $0x1dc] sm:$0xf]
  %v135 = vld [vmem:[%s0 + $0x1e0] sm:$0xf]
  %v136 = vld [vmem:[%s0 + $0x1e4] sm:$0xf]
  %v137 = vld [vmem:[%s0 + $0x1e8] sm:$0xf]
  %v138 = vld [vmem:[%s0 + $0x1ec] sm:$0xf]
  %v139 = vld [vmem:[%s0 + $0x1f0] sm:$0xf]
  %v140 = vld [vmem:[%s0 + $0x1f4] sm:$0xf]
  %v141 = vld [vmem:[%s0 + $0x1f8] sm:$0xf]
  %v142 = vld [vmem:[%s0 + $0x1fc] sm:$0xf]
  %v143 = vld [vmem:[%s0 + $0x200] sm:$0xf]
  %v144 = vld [vmem:[%s0 + $0x204] sm:$0xf]
  %v145 = vld [vmem:[%s0 + $0x208] sm:$0xf]
  %v146 = vld [vmem:[%s0 + $0x20c] sm:$0xf]
  %v147 = vld [vmem:[%s0 + $0x210] sm:$0xf]
  %v148 = vld [vmem:[%s0 + $0x214] sm:$0xf]
  %v149 = vld [vmem:[%s0 + $0x218] sm:$0xf]
  %v150 = vld [vmem:[%s0 + $0x21c] sm:$0xf]
  %v151 = vld [vmem:[%s0 + $0x220] sm:$0xf]
  %v152 = vld [vmem:[%s0 + $0x224] sm:$0xf]
  %v153 = vld [vmem:[%s0 + $0x228] sm:$0xf]
  %v154 = vld [vmem:[%s0 + $0x22c] sm:$0xf]
  %v155 = vld [vmem:[%s0 + $0x230] sm:$0xf]
  %v156 = vld [vmem:[%s0 + $0x234] sm:$0xf]
  %v157 = vld [vmem:[%s0 + $0x238] sm:$0xf]
  %v158 = vld [vmem:[%s0 + $0x23c] sm:$0xf]
  %v159 = vld [vmem:[%s0 + $0x240] sm:$0xf]
  %v160 = vld [vmem:[%s0 + $0x244] sm:$0xf]
  %v161 = vld [vmem:[%s0 + $0x248] sm:$0xf]
  %v162 = vld [vmem:[%s0 + $0x24c] sm:$0xf]
  %v163 = vld [vmem:[%s0 + $0x250] sm:$0xf]
  %v164 = vld [vmem:[%s0 + $0x254] sm:$0xf]
  %v165 = vld [vmem:[%s0 + $0x258] sm:$0xf]
  %v166 = vld [vmem:[%s0 + $0x25c] sm:$0xf]
  %v167 = vld [vmem:[%s0 + $0x260] sm:$0xf]
  %v168 = vld [vmem:[%s0 + $0x264] sm:$0xf]
  %v169 = vld [vmem:[%s0 + $0x268] sm:$0xf]
  %v170 = vld [vmem:[%s0 + $0x26c] sm:$0xf]
  %v171 = vld [vmem:[%s0 + $0x270] sm:$0xf]
  %v172 = vld [vmem:[%s0 + $0x274] sm:$0xf]
  %v173 = vld [vmem:[%s0 + $0x278] sm:$0xf]
  %v174 = vld [vmem:[%s0 + $0x27c] sm:$0xf]
  %v175 = vld [vmem:[%s0 + $0x280] sm:$0xf]
  %v176 = vld [vmem:[%s0 + $0x284] sm:$0xf]
  %v177 = vld [vmem:[%s0 + $0x288] sm:$0xf]
  %v178 = vld [vmem:[%s0 + $0x28c] sm:$0xf]
  %v179 = vld [vmem:[%s0 + $0x290] sm:$0xf]
  %v180 = vld [vmem:[%s0 + $0x294] sm:$0xf]
  %v181 = vld [vmem:[%s0 + $0x298] sm:$0xf]
  %v182 = vld [vmem:[%s0 + $0x29c] sm:$0xf]
  %v183 = vld [vmem:[%s0 + $0x2a0] sm:$0xf]
  %v184 = vld [vmem:[%s0 + $0x2a4] sm:$0xf]
  %v185 = vld [vmem:[%s0 + $0x2a8] sm:$0xf]
  %v186 = vld [vmem:[%s0 + $0x2ac] sm:$0xf]
  %v187 = vld [vmem:[%s0 + $0x2b0] sm:$0xf]
  %v188 = vld [vmem:[%s0 + $0x2b4] sm:$0xf]
  %v189 = vld [vmem:[%s0 + $0x2b8] sm:$0xf]
  %v190 = vld [vmem:[%s0 + $0x2bc] sm:$0xf]
  %v191 = vld [vmem:[%s0 + $0x2c0] sm:$0xf]
  %v192 = vld [vmem:[%s0 + $0x2c4] sm:$0xf]
  %v193 = vld [vmem:[%s0 + $0x2c8] sm:$0xf]
  %v194 = vld [vmem:[%s0 + $0x2cc] sm:$0xf]
  %v195 = vld [vmem:[%s0 + $0x2d0] sm:$0xf]
  %v196 = vld [vmem:[%s0 + $0x2d4] sm:$0xf]
  %v197 = vld [vmem:[%s0 + $0x2d8] sm:$0xf]
  %v198 = vld [vmem:[%s0 + $0x2dc] sm:$0xf]
  %v199 = vld [vmem:[%s0 + $0x2e0] sm:$0xf]
  %v200 = vld [vmem:[%s0 + $0x2e4] sm:$0xf]
  %v201 = vld [vmem:[%s0 + $0x2e8] sm:$0xf]
  %v202 = vld [vmem:[%s0 + $0x2ec] sm:$0xf]
  %v203 = vld [vmem:[%s0 + $0x2f0] sm:$0xf]
  %v204 = vld [vmem:[%s0 + $0x2f4] sm:$0xf]
  %v205 = vld [vmem:[%s0 + $0x2f8] sm:$0xf]
  %v206 = vld [vmem:[%s0 + $0x2fc] sm:$0xf]
  %v207 = vld [vmem:[%s0 + $0x300] sm:$0xf]
  %v208 = vld [vmem:[%s0 + $0x304] sm:$0xf]
  %v209 = vld [vmem:[%s0 + $0x308] sm:$0xf]
  %v210 = vld [vmem:[%s0 + $0x30c] sm:$0xf]
  %v211 = vld [vmem:[%s0 + $0x310] sm:$0xf]
  %v212 = vld [vmem:[%s0 + $0x314] sm:$0xf]
  %v213 = vld [vmem:[%s0 + $0x318] sm:$0xf]
  %v214 = vld [vmem:[%s0 + $0x31c] sm:$0xf]
  %v215 = vld [vmem:[%s0 + $0x320] sm:$0xf]
  %v216 = vld [vmem:[%s0 + $0x324] sm:$0xf]
  %v217 = vld [vmem:[%s0 + $0x328] sm:$0xf]
  %v218 = vld [vmem:[%s0 + $0x32c] sm:$0xf]
  %v219 = vld [vmem:[%s0 + $0x330] sm:$0xf]
  %v220 = vld [vmem:[%s0 + $0x334] sm:$0xf]
  %v221 = vld [vmem:[%s0 + $0x338] sm:$0xf]
  %v222 = vld [vmem:[%s0 + $0x33c] sm:$0xf]
  %v223 = vld [vmem:[%s0 + $0x340] sm:$0xf]
  %v224 = vld [vmem:[%s0 + $0x344] sm:$0xf]
  %v225 = vld [vmem:[%s0 + $0x348] sm:$0xf]
  %v226 = vld [vmem:[%s0 + $0x34c] sm:$0xf]
  %v227 = vld [vmem:[%s0 + $0x350] sm:$0xf]
  %v228 = vld [vmem:[%s0 + $0x354] sm:$0xf]
  %v229 = vld [vmem:[%s0 + $0x358] sm:$0xf]
  %v230 = vld [vmem:[%s0 + $0x35c] sm:$0xf]
  %v231 = vld [vmem:[%s0 + $0x360] sm:$0xf]
  %v232 = vld [vmem:[%s0 + $0x364] sm:$0xf]
  %v233 = vld [vmem:[%s0 + $0x368] sm:$0xf]
  %v234 = vld [vmem:[%s0 + $0x36c] sm:$0xf]
  %v235 = vld [vmem:[%s0 + $0x370] sm:$0xf]
  %v236 = vld [vmem:[%s0 + $0x374] sm:$0xf]
  %v237 = vld [vmem:[%s0 + $0x378] sm:$0xf]
  %v238 = vld [vmem:[%s0 + $0x37c] sm:$0xf]
  %v239 = vld [vmem:[%s0 + $0x380] sm:$0xf]
  %v240 = vld [vmem:[%s0 + $0x384] sm:$0xf]
  %v241 = vld [vmem:[%s0 + $0x388] sm:$0xf]
  %v242 = vld [vmem:[%s0 + $0x38c] sm:$0xf]
  %v243 = vld [vmem:[%s0 + $0x390] sm:$0xf]
  %v244 = vld [vmem:[%s0 + $0x394] sm:$0xf]
  %v245 = vld [vmem:[%s0 + $0x398] sm:$0xf]
  %v246 = vld [vmem:[%s0 + $0x39c] sm:$0xf]
  %v247 = vld [vmem:[%s0 + $0x3a0] sm:$0xf]
  %v248 = vld [vmem:[%s0 + $0x3a4] sm:$0xf]
  %v249 = vld [vmem:[%s0 + $0x3a8] sm:$0xf]
  %v250 = vld [vmem:[%s0 + $0x3ac] sm:$0xf]
  %v251 = vld [vmem:[%s0 + $0x3b0] sm:$0xf]
  %v252 = vld [vmem:[%s0 + $0x3b4] sm:$0xf]
  %v253 = vld [vmem:[%s0 + $0x3b8] sm:$0xf]
  %v254 = vld [vmem:[%s0 + $0x3bc] sm:$0xf]
  %v255 = vld [vmem:[%s0 + $0x3c0] sm:$0xf]
  %v256 = vld [vmem:[%s0 + $0x3c4] sm:$0xf]
  %v257 = vld [vmem:[%s0 + $0x3c8] sm:$0xf]
  %v258 = vld [vmem:[%s0 + $0x3cc] sm:$0xf]
  %v259 = vld [vmem:[%s0 + $0x3d0] sm:$0xf]
  %v260 = vld [vmem:[%s0 + $0x3d4] sm:$0xf]
  %v261 = vld [vmem:[%s0 + $0x3d8] sm:$0xf]
  %v262 = vld [vmem:[%s0 + $0x3dc] sm:$0xf]
  %v263 = vld [vmem:[%s0 + $0x3e0] sm:$0xf]
  %v264 = vld [vmem:[%s0 + $0x3e4] sm:$0xf]
  %v265 = vld [vmem:[%s0 + $0x3e8] sm:$0xf]
  %v266 = vld [vmem:[%s0 + $0x3ec] sm:$0xf]
  %v267 = vld [vmem:[%s0 + $0x3f0] sm:$0xf]
  %v268 = vld [vmem:[%s0 + $0x3f4] sm:$0xf]
  %v269 = vld [vmem:[%s0 + $0x3f8] sm:$0xf]
  %v270 = vld [vmem:[%s0 + $0x3fc] sm:$0xf]
  %v271 = vld [vmem:[%s1] sm:$0xf]
  %v272 = vld [vmem:[%s1 + $0x4] sm:$0xf]
  %v273 = vld [vmem:[%s1 + $0x8] sm:$0xf]
  %v274 = vld [vmem:[%s1 + $0xc] sm:$0x3]
  %v275 = vld [vmem:[%s2] sm:$0x1]
  %v277 = vlaneseq
  %v278 = vshrl.u32 %v277, 7
  %v279 = vsub.s32 0, %v278
  %v280 = vrot.slane %v275, %v279
  %v538 = vunpack.c.l.b16 %v15
  %v539 = vunpack.c.l.b16 %v16
  %v540 = vunpack.c.l.b16 %v17
  %v541 = vunpack.c.l.b16 %v18
  %v542 = vunpack.c.l.b16 %v19
  %v543 = vunpack.c.l.b16 %v20
  %v544 = vunpack.c.l.b16 %v21
  %v545 = vunpack.c.l.b16 %v22
  %v546 = vunpack.c.l.b16 %v23
  %v547 = vunpack.c.l.b16 %v24
  %v548 = vunpack.c.l.b16 %v25
  %v549 = vunpack.c.l.b16 %v26
  %v550 = vunpack.c.l.b16 %v27
  %v551 = vunpack.c.l.b16 %v28
  %v552 = vunpack.c.l.b16 %v29
  %v553 = vunpack.c.l.b16 %v30
  %v554 = vunpack.c.l.b16 %v31
  %v555 = vunpack.c.l.b16 %v32
  %v556 = vunpack.c.l.b16 %v33
  %v557 = vunpack.c.l.b16 %v34
  %v558 = vunpack.c.l.b16 %v35
  %v559 = vunpack.c.l.b16 %v36
  %v560 = vunpack.c.l.b16 %v37
  %v561 = vunpack.c.l.b16 %v38
  %v562 = vunpack.c.l.b16 %v39
  %v563 = vunpack.c.l.b16 %v40
  %v564 = vunpack.c.l.b16 %v41
  %v565 = vunpack.c.l.b16 %v42
  %v566 = vunpack.c.l.b16 %v43
  %v567 = vunpack.c.l.b16 %v44
  %v568 = vunpack.c.l.b16 %v45
  %v569 = vunpack.c.l.b16 %v46
  %v570 = vunpack.c.l.b16 %v47
  %v571 = vunpack.c.l.b16 %v48
  %v572 = vunpack.c.l.b16 %v49
  %v573 = vunpack.c.l.b16 %v50
  %v574 = vunpack.c.l.b16 %v51
  %v575 = vunpack.c.l.b16 %v52
  %v576 = vunpack.c.l.b16 %v53
  %v577 = vunpack.c.l.b16 %v54
  %v578 = vunpack.c.l.b16 %v55
  %v579 = vunpack.c.l.b16 %v56
  %v580 = vunpack.c.l.b16 %v57
  %v581 = vunpack.c.l.b16 %v58
  %v582 = vunpack.c.l.b16 %v59
  %v583 = vunpack.c.l.b16 %v60
  %v584 = vunpack.c.l.b16 %v61
  %v585 = vunpack.c.l.b16 %v62
  %v586 = vunpack.c.l.b16 %v63
  %v587 = vunpack.c.l.b16 %v64
  %v588 = vunpack.c.l.b16 %v65
  %v589 = vunpack.c.l.b16 %v66
  %v590 = vunpack.c.l.b16 %v67
  %v591 = vunpack.c.l.b16 %v68
  %v592 = vunpack.c.l.b16 %v69
  %v593 = vunpack.c.l.b16 %v70
  %v594 = vunpack.c.l.b16 %v71
  %v595 = vunpack.c.l.b16 %v72
  %v596 = vunpack.c.l.b16 %v73
  %v597 = vunpack.c.l.b16 %v74
  %v598 = vunpack.c.l.b16 %v75
  %v599 = vunpack.c.l.b16 %v76
  %v600 = vunpack.c.l.b16 %v77
  %v601 = vunpack.c.l.b16 %v78
  %v602 = vunpack.c.l.b16 %v79
  %v603 = vunpack.c.l.b16 %v80
  %v604 = vunpack.c.l.b16 %v81
  %v605 = vunpack.c.l.b16 %v82
  %v606 = vunpack.c.l.b16 %v83
  %v607 = vunpack.c.l.b16 %v84
  %v608 = vunpack.c.l.b16 %v85
  %v609 = vunpack.c.l.b16 %v86
  %v610 = vunpack.c.l.b16 %v87
  %v611 = vunpack.c.l.b16 %v88
  %v612 = vunpack.c.l.b16 %v89
  %v613 = vunpack.c.l.b16 %v90
  %v614 = vunpack.c.l.b16 %v91
  %v615 = vunpack.c.l.b16 %v92
  %v616 = vunpack.c.l.b16 %v93
  %v617 = vunpack.c.l.b16 %v94
  %v618 = vunpack.c.l.b16 %v95
  %v619 = vunpack.c.l.b16 %v96
  %v620 = vunpack.c.l.b16 %v97
  %v621 = vunpack.c.l.b16 %v98
  %v622 = vunpack.c.l.b16 %v99
  %v623 = vunpack.c.l.b16 %v100
  %v624 = vunpack.c.l.b16 %v101
  %v625 = vunpack.c.l.b16 %v102
  %v626 = vunpack.c.l.b16 %v103
  %v627 = vunpack.c.l.b16 %v104
  %v628 = vunpack.c.l.b16 %v105
  %v629 = vunpack.c.l.b16 %v106
  %v630 = vunpack.c.l.b16 %v107
  %v631 = vunpack.c.l.b16 %v108
  %v632 = vunpack.c.l.b16 %v109
  %v633 = vunpack.c.l.b16 %v110
  %v634 = vunpack.c.l.b16 %v111
  %v635 = vunpack.c.l.b16 %v112
  %v636 = vunpack.c.l.b16 %v113
  %v637 = vunpack.c.l.b16 %v114
  %v638 = vunpack.c.l.b16 %v115
  %v639 = vunpack.c.l.b16 %v116
  %v640 = vunpack.c.l.b16 %v117
  %v641 = vunpack.c.l.b16 %v118
  %v642 = vunpack.c.l.b16 %v119
  %v643 = vunpack.c.l.b16 %v120
  %v644 = vunpack.c.l.b16 %v121
  %v645 = vunpack.c.l.b16 %v122
  %v646 = vunpack.c.l.b16 %v123
  %v647 = vunpack.c.l.b16 %v124
  %v648 = vunpack.c.l.b16 %v125
  %v649 = vunpack.c.l.b16 %v126
  %v650 = vunpack.c.l.b16 %v127
  %v651 = vunpack.c.l.b16 %v128
  %v652 = vunpack.c.l.b16 %v129
  %v653 = vunpack.c.l.b16 %v130
  %v654 = vunpack.c.l.b16 %v131
  %v655 = vunpack.c.l.b16 %v132
  %v656 = vunpack.c.l.b16 %v133
  %v657 = vunpack.c.l.b16 %v134
  %v658 = vunpack.c.l.b16 %v135
  %v659 = vunpack.c.l.b16 %v136
  %v660 = vunpack.c.l.b16 %v137
  %v661 = vunpack.c.l.b16 %v138
  %v662 = vunpack.c.l.b16 %v139
  %v663 = vunpack.c.l.b16 %v140
  %v664 = vunpack.c.l.b16 %v141
  %v665 = vunpack.c.l.b16 %v142
  %v666 = vunpack.c.l.b16 %v143
  %v667 = vunpack.c.l.b16 %v144
  %v668 = vunpack.c.l.b16 %v145
  %v669 = vunpack.c.l.b16 %v146
  %v670 = vunpack.c.l.b16 %v147
  %v671 = vunpack.c.l.b16 %v148
  %v672 = vunpack.c.l.b16 %v149
  %v673 = vunpack.c.l.b16 %v150
  %v674 = vunpack.c.l.b16 %v151
  %v675 = vunpack.c.l.b16 %v152
  %v676 = vunpack.c.l.b16 %v153
  %v677 = vunpack.c.l.b16 %v154
  %v678 = vunpack.c.l.b16 %v155
  %v679 = vunpack.c.l.b16 %v156
  %v680 = vunpack.c.l.b16 %v157
  %v681 = vunpack.c.l.b16 %v158
  %v682 = vunpack.c.l.b16 %v159
  %v683 = vunpack.c.l.b16 %v160
  %v684 = vunpack.c.l.b16 %v161
  %v685 = vunpack.c.l.b16 %v162
  %v686 = vunpack.c.l.b16 %v163
  %v687 = vunpack.c.l.b16 %v164
  %v688 = vunpack.c.l.b16 %v165
  %v689 = vunpack.c.l.b16 %v166
  %v690 = vunpack.c.l.b16 %v167
  %v691 = vunpack.c.l.b16 %v168
  %v692 = vunpack.c.l.b16 %v169
  %v693 = vunpack.c.l.b16 %v170
  %v694 = vunpack.c.l.b16 %v171
  %v695 = vunpack.c.l.b16 %v172
  %v696 = vunpack.c.l.b16 %v173
  %v697 = vunpack.c.l.b16 %v174
  %v698 = vunpack.c.l.b16 %v175
  %v699 = vunpack.c.l.b16 %v176
  %v700 = vunpack.c.l.b16 %v177
  %v701 = vunpack.c.l.b16 %v178
  %v702 = vunpack.c.l.b16 %v179
  %v703 = vunpack.c.l.b16 %v180
  %v704 = vunpack.c.l.b16 %v181
  %v705 = vunpack.c.l.b16 %v182
  %v706 = vunpack.c.l.b16 %v183
  %v707 = vunpack.c.l.b16 %v184
  %v708 = vunpack.c.l.b16 %v185
  %v709 = vunpack.c.l.b16 %v186
  %v710 = vunpack.c.l.b16 %v187
  %v711 = vunpack.c.l.b16 %v188
  %v712 = vunpack.c.l.b16 %v189
  %v713 = vunpack.c.l.b16 %v190
  %v714 = vunpack.c.l.b16 %v191
  %v715 = vunpack.c.l.b16 %v192
  %v716 = vunpack.c.l.b16 %v193
  %v717 = vunpack.c.l.b16 %v194
  %v718 = vunpack.c.l.b16 %v195
  %v719 = vunpack.c.l.b16 %v196
  %v720 = vunpack.c.l.b16 %v197
  %v721 = vunpack.c.l.b16 %v198
  %v722 = vunpack.c.l.b16 %v199
  %v723 = vunpack.c.l.b16 %v200
  %v724 = vunpack.c.l.b16 %v201
  %v725 = vunpack.c.l.b16 %v202
  %v726 = vunpack.c.l.b16 %v203
  %v727 = vunpack.c.l.b16 %v204
  %v728 = vunpack.c.l.b16 %v205
  %v729 = vunpack.c.l.b16 %v206
  %v730 = vunpack.c.l.b16 %v207
  %v731 = vunpack.c.l.b16 %v208
  %v732 = vunpack.c.l.b16 %v209
  %v733 = vunpack.c.l.b16 %v210
  %v734 = vunpack.c.l.b16 %v211
  %v735 = vunpack.c.l.b16 %v212
  %v736 = vunpack.c.l.b16 %v213
  %v737 = vunpack.c.l.b16 %v214
  %v738 = vunpack.c.l.b16 %v215
  %v739 = vunpack.c.l.b16 %v216
  %v740 = vunpack.c.l.b16 %v217
  %v741 = vunpack.c.l.b16 %v218
  %v742 = vunpack.c.l.b16 %v219
  %v743 = vunpack.c.l.b16 %v220
  %v744 = vunpack.c.l.b16 %v221
  %v745 = vunpack.c.l.b16 %v222
  %v746 = vunpack.c.l.b16 %v223
  %v747 = vunpack.c.l.b16 %v224
  %v748 = vunpack.c.l.b16 %v225
  %v749 = vunpack.c.l.b16 %v226
  %v750 = vunpack.c.l.b16 %v227
  %v751 = vunpack.c.l.b16 %v228
  %v752 = vunpack.c.l.b16 %v229
  %v753 = vunpack.c.l.b16 %v230
  %v754 = vunpack.c.l.b16 %v231
  %v755 = vunpack.c.l.b16 %v232
  %v756 = vunpack.c.l.b16 %v233
  %v757 = vunpack.c.l.b16 %v234
  %v758 = vunpack.c.l.b16 %v235
  %v759 = vunpack.c.l.b16 %v236
  %v760 = vunpack.c.l.b16 %v237
  %v761 = vunpack.c.l.b16 %v238
  %v762 = vunpack.c.l.b16 %v239
  %v763 = vunpack.c.l.b16 %v240
  %v764 = vunpack.c.l.b16 %v241
  %v765 = vunpack.c.l.b16 %v242
  %v766 = vunpack.c.l.b16 %v243
  %v767 = vunpack.c.l.b16 %v244
  %v768 = vunpack.c.l.b16 %v245
  %v769 = vunpack.c.l.b16 %v246
  %v770 = vunpack.c.l.b16 %v247
  %v771 = vunpack.c.l.b16 %v248
  %v772 = vunpack.c.l.b16 %v249
  %v773 = vunpack.c.l.b16 %v250
  %v774 = vunpack.c.l.b16 %v251
  %v775 = vunpack.c.l.b16 %v252
  %v776 = vunpack.c.l.b16 %v253
  %v777 = vunpack.c.l.b16 %v254
  %v778 = vunpack.c.l.b16 %v255
  %v779 = vunpack.c.l.b16 %v256
  %v780 = vunpack.c.l.b16 %v257
  %v781 = vunpack.c.l.b16 %v258
  %v782 = vunpack.c.l.b16 %v259
  %v783 = vunpack.c.l.b16 %v260
  %v784 = vunpack.c.l.b16 %v261
  %v785 = vunpack.c.l.b16 %v262
  %v786 = vunpack.c.l.b16 %v263
  %v787 = vunpack.c.l.b16 %v264
  %v788 = vunpack.c.l.b16 %v265
  %v789 = vunpack.c.l.b16 %v266
  %v790 = vunpack.c.l.b16 %v267
  %v791 = vunpack.c.l.b16 %v268
  %v792 = vunpack.c.l.b16 %v269
  %v793 = vunpack.c.l.b16 %v270
  %v794 = vpack.c.b16 %v539, %v538
  %v795 = vpack.c.b16 %v541, %v540
  %v796 = vpack.c.b16 %v543, %v542
  %v797 = vpack.c.b16 %v545, %v544
  %v798 = vpack.c.b16 %v547, %v546
  %v799 = vpack.c.b16 %v549, %v548
  %v800 = vpack.c.b16 %v551, %v550
  %v801 = vpack.c.b16 %v553, %v552
  %v802 = vpack.c.b16 %v555, %v554
  %v803 = vpack.c.b16 %v557, %v556
  %v804 = vpack.c.b16 %v559, %v558
  %v805 = vpack.c.b16 %v561, %v560
  %v806 = vpack.c.b16 %v563, %v562
  %v807 = vpack.c.b16 %v565, %v564
  %v808 = vpack.c.b16 %v567, %v566
  %v809 = vpack.c.b16 %v569, %v568
  %v810 = vpack.c.b16 %v571, %v570
  %v811 = vpack.c.b16 %v573, %v572
  %v812 = vpack.c.b16 %v575, %v574
  %v813 = vpack.c.b16 %v577, %v576
  %v814 = vpack.c.b16 %v579, %v578
  %v815 = vpack.c.b16 %v581, %v580
  %v816 = vpack.c.b16 %v583, %v582
  %v817 = vpack.c.b16 %v585, %v584
  %v818 = vpack.c.b16 %v587, %v586
  %v819 = vpack.c.b16 %v589, %v588
  %v820 = vpack.c.b16 %v591, %v590
  %v821 = vpack.c.b16 %v593, %v592
  %v822 = vpack.c.b16 %v595, %v594
  %v823 = vpack.c.b16 %v597, %v596
  %v824 = vpack.c.b16 %v599, %v598
  %v825 = vpack.c.b16 %v601, %v600
  %v826 = vpack.c.b16 %v603, %v602
  %v827 = vpack.c.b16 %v605, %v604
  %v828 = vpack.c.b16 %v607, %v606
  %v829 = vpack.c.b16 %v609, %v608
  %v830 = vpack.c.b16 %v611, %v610
  %v831 = vpack.c.b16 %v613, %v612
  %v832 = vpack.c.b16 %v615, %v614
  %v833 = vpack.c.b16 %v617, %v616
  %v834 = vpack.c.b16 %v619, %v618
  %v835 = vpack.c.b16 %v621, %v620
  %v836 = vpack.c.b16 %v623, %v622
  %v837 = vpack.c.b16 %v625, %v624
  %v838 = vpack.c.b16 %v627, %v626
  %v839 = vpack.c.b16 %v629, %v628
  %v840 = vpack.c.b16 %v631, %v630
  %v841 = vpack.c.b16 %v633, %v632
  %v842 = vpack.c.b16 %v635, %v634
  %v843 = vpack.c.b16 %v637, %v636
  %v844 = vpack.c.b16 %v639, %v638
  %v845 = vpack.c.b16 %v641, %v640
  %v846 = vpack.c.b16 %v643, %v642
  %v847 = vpack.c.b16 %v645, %v644
  %v848 = vpack.c.b16 %v647, %v646
  %v849 = vpack.c.b16 %v649, %v648
  %v850 = vpack.c.b16 %v651, %v650
  %v851 = vpack.c.b16 %v653, %v652
  %v852 = vpack.c.b16 %v655, %v654
  %v853 = vpack.c.b16 %v657, %v656
  %v854 = vpack.c.b16 %v659, %v658
  %v855 = vpack.c.b16 %v661, %v660
  %v856 = vpack.c.b16 %v663, %v662
  %v857 = vpack.c.b16 %v665, %v664
  %v858 = vpack.c.b16 %v667, %v666
  %v859 = vpack.c.b16 %v669, %v668
  %v860 = vpack.c.b16 %v671, %v670
  %v861 = vpack.c.b16 %v673, %v672
  %v862 = vpack.c.b16 %v675, %v674
  %v863 = vpack.c.b16 %v677, %v676
  %v864 = vpack.c.b16 %v679, %v678
  %v865 = vpack.c.b16 %v681, %v680
  %v866 = vpack.c.b16 %v683, %v682
  %v867 = vpack.c.b16 %v685, %v684
  %v868 = vpack.c.b16 %v687, %v686
  %v869 = vpack.c.b16 %v689, %v688
  %v870 = vpack.c.b16 %v691, %v690
  %v871 = vpack.c.b16 %v693, %v692
  %v872 = vpack.c.b16 %v695, %v694
  %v873 = vpack.c.b16 %v697, %v696
  %v874 = vpack.c.b16 %v699, %v698
  %v875 = vpack.c.b16 %v701, %v700
  %v876 = vpack.c.b16 %v703, %v702
  %v877 = vpack.c.b16 %v705, %v704
  %v878 = vpack.c.b16 %v707, %v706
  %v879 = vpack.c.b16 %v709, %v708
  %v880 = vpack.c.b16 %v711, %v710
  %v881 = vpack.c.b16 %v713, %v712
  %v882 = vpack.c.b16 %v715, %v714
  %v883 = vpack.c.b16 %v717, %v716
  %v884 = vpack.c.b16 %v719, %v718
  %v885 = vpack.c.b16 %v721, %v720
  %v886 = vpack.c.b16 %v723, %v722
  %v887 = vpack.c.b16 %v725, %v724
  %v888 = vpack.c.b16 %v727, %v726
  %v889 = vpack.c.b16 %v729, %v728
  %v890 = vpack.c.b16 %v731, %v730
  %v891 = vpack.c.b16 %v733, %v732
  %v892 = vpack.c.b16 %v735, %v734
  %v893 = vpack.c.b16 %v737, %v736
  %v894 = vpack.c.b16 %v739, %v738
  %v895 = vpack.c.b16 %v741, %v740
  %v896 = vpack.c.b16 %v743, %v742
  %v897 = vpack.c.b16 %v745, %v744
  %v898 = vpack.c.b16 %v747, %v746
  %v899 = vpack.c.b16 %v749, %v748
  %v900 = vpack.c.b16 %v751, %v750
  %v901 = vpack.c.b16 %v753, %v752
  %v902 = vpack.c.b16 %v755, %v754
  %v903 = vpack.c.b16 %v757, %v756
  %v904 = vpack.c.b16 %v759, %v758
  %v905 = vpack.c.b16 %v761, %v760
  %v906 = vpack.c.b16 %v763, %v762
  %v907 = vpack.c.b16 %v765, %v764
  %v908 = vpack.c.b16 %v767, %v766
  %v909 = vpack.c.b16 %v769, %v768
  %v910 = vpack.c.b16 %v771, %v770
  %v911 = vpack.c.b16 %v773, %v772
  %v912 = vpack.c.b16 %v775, %v774
  %v913 = vpack.c.b16 %v777, %v776
  %v914 = vpack.c.b16 %v779, %v778
  %v915 = vpack.c.b16 %v781, %v780
  %v916 = vpack.c.b16 %v783, %v782
  %v917 = vpack.c.b16 %v785, %v784
  %v918 = vpack.c.b16 %v787, %v786
  %v919 = vpack.c.b16 %v789, %v788
  %v920 = vpack.c.b16 %v791, %v790
  %v921 = vpack.c.b16 %v793, %v792
  %v926 = vunpack.c.l.b16 %v271
  %v927 = vunpack.c.l.b16 %v272
  %v928 = vunpack.c.l.b16 %v273
  %v929 = vunpack.c.l.b16 %v274
  %v930 = vpack.c.b16 %v927, %v926
  %v931 = vpack.c.b16 %v929, %v928
  %vm933 = vcmask 220160
  %v935 = vsel %vm933, %v794, 0
  %v938 = vsel %vm933, %v795, 0
  %v941 = vsel %vm933, %v796, 0
  %v944 = vsel %vm933, %v797, 0
  %v947 = vsel %vm933, %v798, 0
  %v950 = vsel %vm933, %v799, 0
  %v953 = vsel %vm933, %v800, 0
  %v956 = vsel %vm933, %v801, 0
  %v959 = vsel %vm933, %v802, 0
  %v962 = vsel %vm933, %v803, 0
  %v965 = vsel %vm933, %v804, 0
  %v968 = vsel %vm933, %v805, 0
  %v971 = vsel %vm933, %v806, 0
  %v974 = vsel %vm933, %v807, 0
  %v977 = vsel %vm933, %v808, 0
  %v980 = vsel %vm933, %v809, 0
  %v983 = vsel %vm933, %v810, 0
  %v986 = vsel %vm933, %v811, 0
  %v989 = vsel %vm933, %v812, 0
  %v992 = vsel %vm933, %v813, 0
  %v995 = vsel %vm933, %v814, 0
  %v998 = vsel %vm933, %v815, 0
  %v1001 = vsel %vm933, %v816, 0
  %v1004 = vsel %vm933, %v817, 0
  %v1007 = vsel %vm933, %v818, 0
  %v1010 = vsel %vm933, %v819, 0
  %v1013 = vsel %vm933, %v820, 0
  %v1016 = vsel %vm933, %v821, 0
  %v1019 = vsel %vm933, %v822, 0
  %v1022 = vsel %vm933, %v823, 0
  %v1025 = vsel %vm933, %v824, 0
  %v1028 = vsel %vm933, %v825, 0
  %v1031 = vsel %vm933, %v826, 0
  %v1034 = vsel %vm933, %v827, 0
  %v1037 = vsel %vm933, %v828, 0
  %v1040 = vsel %vm933, %v829, 0
  %v1043 = vsel %vm933, %v830, 0
  %v1046 = vsel %vm933, %v831, 0
  %v1049 = vsel %vm933, %v832, 0
  %v1052 = vsel %vm933, %v833, 0
  %v1055 = vsel %vm933, %v834, 0
  %v1058 = vsel %vm933, %v835, 0
  %v1061 = vsel %vm933, %v836, 0
  %v1064 = vsel %vm933, %v837, 0
  %v1067 = vsel %vm933, %v838, 0
  %v1070 = vsel %vm933, %v839, 0
  %v1073 = vsel %vm933, %v840, 0
  %v1076 = vsel %vm933, %v841, 0
  %v1079 = vsel %vm933, %v842, 0
  %v1082 = vsel %vm933, %v843, 0
  %v1085 = vsel %vm933, %v844, 0
  %v1088 = vsel %vm933, %v845, 0
  %v1091 = vsel %vm933, %v846, 0
  %v1094 = vsel %vm933, %v847, 0
  %v1097 = vsel %vm933, %v848, 0
  %v1100 = vsel %vm933, %v849, 0
  %v1103 = vsel %vm933, %v850, 0
  %v1106 = vsel %vm933, %v851, 0
  %v1109 = vsel %vm933, %v852, 0
  %v1112 = vsel %vm933, %v853, 0
  %v1115 = vsel %vm933, %v854, 0
  %v1118 = vsel %vm933, %v855, 0
  %v1121 = vsel %vm933, %v856, 0
  %v1124 = vsel %vm933, %v857, 0
  %v1127 = vsel %vm933, %v858, 0
  %v1130 = vsel %vm933, %v859, 0
  %v1133 = vsel %vm933, %v860, 0
  %v1136 = vsel %vm933, %v861, 0
  %v1139 = vsel %vm933, %v862, 0
  %v1142 = vsel %vm933, %v863, 0
  %v1145 = vsel %vm933, %v864, 0
  %v1148 = vsel %vm933, %v865, 0
  %v1151 = vsel %vm933, %v866, 0
  %v1154 = vsel %vm933, %v867, 0
  %v1157 = vsel %vm933, %v868, 0
  %v1160 = vsel %vm933, %v869, 0
  %v1163 = vsel %vm933, %v870, 0
  %v1166 = vsel %vm933, %v871, 0
  %v1169 = vsel %vm933, %v872, 0
  %v1172 = vsel %vm933, %v873, 0
  %v1175 = vsel %vm933, %v874, 0
  %v1178 = vsel %vm933, %v875, 0
  %v1181 = vsel %vm933, %v876, 0
  %v1184 = vsel %vm933, %v877, 0
  %v1187 = vsel %vm933, %v878, 0
  %v1190 = vsel %vm933, %v879, 0
  %v1193 = vsel %vm933, %v880, 0
  %v1196 = vsel %vm933, %v881, 0
  %v1199 = vsel %vm933, %v882, 0
  %v1202 = vsel %vm933, %v883, 0
  %v1205 = vsel %vm933, %v884, 0
  %v1208 = vsel %vm933, %v885, 0
  %v1211 = vsel %vm933, %v886, 0
  %v1214 = vsel %vm933, %v887, 0
  %v1217 = vsel %vm933, %v888, 0
  %v1220 = vsel %vm933, %v889, 0
  %v1223 = vsel %vm933, %v890, 0
  %v1226 = vsel %vm933, %v891, 0
  %v1229 = vsel %vm933, %v892, 0
  %v1232 = vsel %vm933, %v893, 0
  %v1235 = vsel %vm933, %v894, 0
  %v1238 = vsel %vm933, %v895, 0
  %v1241 = vsel %vm933, %v896, 0
  %v1244 = vsel %vm933, %v897, 0
  %v1247 = vsel %vm933, %v898, 0
  %v1250 = vsel %vm933, %v899, 0
  %v1253 = vsel %vm933, %v900, 0
  %v1256 = vsel %vm933, %v901, 0
  %v1259 = vsel %vm933, %v902, 0
  %v1262 = vsel %vm933, %v903, 0
  %v1265 = vsel %vm933, %v904, 0
  %v1268 = vsel %vm933, %v905, 0
  %v1271 = vsel %vm933, %v906, 0
  %v1274 = vsel %vm933, %v907, 0
  %v1277 = vsel %vm933, %v908, 0
  %v1280 = vsel %vm933, %v909, 0
  %v1283 = vsel %vm933, %v910, 0
  %v1286 = vsel %vm933, %v911, 0
  %v1289 = vsel %vm933, %v912, 0
  %v1292 = vsel %vm933, %v913, 0
  %v1295 = vsel %vm933, %v914, 0
  %v1298 = vsel %vm933, %v915, 0
  %v1301 = vsel %vm933, %v916, 0
  %v1304 = vsel %vm933, %v917, 0
  %v1307 = vsel %vm933, %v918, 0
  %v1310 = vsel %vm933, %v919, 0
  %v1313 = vsel %vm933, %v920, 0
  %v1316 = vsel %vm933, %v921, 0
  %vm1318 = vcmask 1044480
  %vm1319 = vcmask 1045504
  %v1320 = vsel %vm1318, 4294967295, 65535
  %v1321 = vsel %vm1319, %v1320, 0
  %v1323 = vand.u32 %v931, %v1321
  %1325 = vmatprep.subr.bf16.mxu0 0
  %1326 = vmatpush1.bf16.msra.mxu0 %v930
  %1327 = vmatprep.subr.bf16.mxu0 0
  %1328 = vmatpush1.bf16.msra.mxu0 %v1323
  %1329 = vmatprep.subr.bf16.mxu0 0
  %1330 = vmatpush1.bf16.msra.mxu0 0
  %1331 = vmatprep.subr.bf16.mxu0 0
  %1332 = vmatpush1.bf16.msra.mxu0 0
  %1333 = vmatprep.subr.bf16.mxu0 0
  %1334 = vmatpush1.bf16.msra.mxu0 0
  %1335 = vmatprep.subr.bf16.mxu0 0
  %1336 = vmatpush1.bf16.msra.mxu0 0
  %1337 = vmatprep.subr.bf16.mxu0 0
  %1338 = vmatpush1.bf16.msra.mxu0 0
  %1339 = vmatprep.subr.bf16.mxu0 0
  %1340 = vmatpush1.bf16.msra.mxu0 0
  %1341 = vmatprep.subr.bf16.mxu0 0
  %1342 = vmatpush1.bf16.msra.mxu0 0
  %1343 = vmatprep.subr.bf16.mxu0 0
  %1344 = vmatpush1.bf16.msra.mxu0 0
  %1345 = vmatprep.subr.bf16.mxu0 0
  %1346 = vmatpush1.bf16.msra.mxu0 0
  %1347 = vmatprep.subr.bf16.mxu0 0
  %1348 = vmatpush1.bf16.msra.mxu0 0
  %1349 = vmatprep.subr.bf16.mxu0 0
  %1350 = vmatpush1.bf16.msra.mxu0 0
  %1351 = vmatprep.subr.bf16.mxu0 0
  %1352 = vmatpush1.bf16.msra.mxu0 0
  %1353 = vmatprep.subr.bf16.mxu0 0
  %1354 = vmatpush1.bf16.msra.mxu0 0
  %1355 = vmatprep.subr.bf16.mxu0 0
  %1356 = vmatpush1.bf16.msra.mxu0 0
  %1357 = vmatprep.mubr.bf16.mxu0 0
  %1358 = vmatmul.mubr.bf16.gmra.mrb[0].mxu0 %v935
  %v1359 = vpop.f32.mrb[0].mxu0
  %v1360 = vadd.f32 %v280, %v1359
  %v1361 = vpop.f32.mrb[0].mxu0
  %v1362 = vpop.f32.mrb[0].mxu0
  %v1363 = vadd.f32 %v280, %v1362
  %v1364 = vpop.f32.mrb[0].mxu0
  %1365 = vmatprep.mubr.bf16.mxu0 0
  %1366 = vmatmul.mubr.bf16.gmra.mrb[0].mxu0 %v938
  %v1367 = vpop.f32.mrb[0].mxu0
  %v1368 = vadd.f32 %v280, %v1367
  %v1369 = vpop.f32.mrb[0].mxu0
  %v1370 = vpop.f32.mrb[0].mxu0
  %v1371 = vadd.f32 %v280, %v1370
  %v1372 = vpop.f32.mrb[0].mxu0
  %1373 = vmatprep.mubr.bf16.mxu0 0
  %1374 = vmatmul.mubr.bf16.gmra.mrb[0].mxu0 %v941
  %v1375 = vpop.f32.mrb[0].mxu0
  %v1376 = vadd.f32 %v280, %v1375
  %v1377 = vpop.f32.mrb[0].mxu0
  %v1378 = vpop.f32.mrb[0].mxu0
  %v1379 = vadd.f32 %v280, %v1378
  %v1380 = vpop.f32.mrb[0].mxu0
  %1381 = vmatprep.mubr.bf16.mxu0 0
  %1382 = vmatmul.mubr.bf16.gmra.mrb[0].mxu0 %v944
  %v1383 = vpop.f32.mrb[0].mxu0
  %v1384 = vadd.f32 %v280, %v1383
  %v1385 = vpop.f32.mrb[0].mxu0
  %v1386 = vpop.f32.mrb[0].mxu0
  %v1387 = vadd.f32 %v280, %v1386
  %v1388 = vpop.f32.mrb[0].mxu0
  %1389 = vmatprep.mubr.bf16.mxu0 0
  %1390 = vmatmul.mubr.bf16.gmra.mrb[0].mxu0 %v947
  %v1391 = vpop.f32.mrb[0].mxu0
  %v1392 = vadd.f32 %v280, %v1391
  %v1393 = vpop.f32.mrb[0].mxu0
  %v1394 = vpop.f32.mrb[0].mxu0
  %v1395 = vadd.f32 %v280, %v1394
  %v1396 = vpop.f32.mrb[0].mxu0
  %1397 = vmatprep.mubr.bf16.mxu0 0
  %1398 = vmatmul.mubr.bf16.gmra.mrb[0].mxu0 %v950
  %v1399 = vpop.f32.mrb[0].mxu0
  %v1400 = vadd.f32 %v280, %v1399
  %v1401 = vpop.f32.mrb[0].mxu0
  %v1402 = vpop.f32.mrb[0].mxu0
  %v1403 = vadd.f32 %v280, %v1402
  %v1404 = vpop.f32.mrb[0].mxu0
  %1405 = vmatprep.mubr.bf16.mxu0 0
  %1406 = vmatmul.mubr.bf16.gmra.mrb[0].mxu0 %v953
  %v1407 = vpop.f32.mrb[0].mxu0
  %v1408 = vadd.f32 %v280, %v1407
  %v1409 = vpop.f32.mrb[0].mxu0
  %v1410 = vpop.f32.mrb[0].mxu0
  %v1411 = vadd.f32 %v280, %v1410
  %v1412 = vpop.f32.mrb[0].mxu0
  %1413 = vmatprep.mubr.bf16.mxu0 0
  %1414 = vmatmul.mubr.bf16.gmra.mrb[0].mxu0 %v956
  %v1415 = vpop.f32.mrb[0].mxu0
  %v1416 = vadd.f32 %v280, %v1415
  %v1417 = vpop.f32.mrb[0].mxu0
  %v1418 = vpop.f32.mrb[0].mxu0
  %v1419 = vadd.f32 %v280, %v1418
  %v1420 = vpop.f32.mrb[0].mxu0
  %1421 = vmatprep.mubr.bf16.mxu0 0
  %1422 = vmatmul.mubr.bf16.gmra.mrb[0].mxu0 %v959
  %v1423 = vpop.f32.mrb[0].mxu0
  %v1424 = vadd.f32 %v280, %v1423
  %v1425 = vpop.f32.mrb[0].mxu0
  %v1426 = vpop.f32.mrb[0].mxu0
  %v1427 = vadd.f32 %v280, %v1426
  %v1428 = vpop.f32.mrb[0].mxu0
  %1429 = vmatprep.mubr.bf16.mxu0 0
  %1430 = vmatmul.mubr.bf16.gmra.mrb[0].mxu0 %v962
  %v1431 = vpop.f32.mrb[0].mxu0
  %v1432 = vadd.f32 %v280, %v1431
  %v1433 = vpop.f32.mrb[0].mxu0
  %v1434 = vpop.f32.mrb[0].mxu0
  %v1435 = vadd.f32 %v280, %v1434
  %v1436 = vpop.f32.mrb[0].mxu0
  %1437 = vmatprep.mubr.bf16.mxu0 0
  %1438 = vmatmul.mubr.bf16.gmra.mrb[0].mxu0 %v965
  %v1439 = vpop.f32.mrb[0].mxu0
  %v1440 = vadd.f32 %v280, %v1439
  %v1441 = vpop.f32.mrb[0].mxu0
  %v1442 = vpop.f32.mrb[0].mxu0
  %v1443 = vadd.f32 %v280, %v1442
  %v1444 = vpop.f32.mrb[0].mxu0
  %1445 = vmatprep.mubr.bf16.mxu0 0
  %1446 = vmatmul.mubr.bf16.gmra.mrb[0].mxu0 %v968
  %v1447 = vpop.f32.mrb[0].mxu0
  %v1448 = vadd.f32 %v280, %v1447
  %v1449 = vpop.f32.mrb[0].mxu0
  %v1450 = vpop.f32.mrb[0].mxu0
  %v1451 = vadd.f32 %v280, %v1450
  %v1452 = vpop.f32.mrb[0].mxu0
  %1453 = vmatprep.mubr.bf16.mxu0 0
  %1454 = vmatmul.mubr.bf16.gmra.mrb[0].mxu0 %v971
  %v1455 = vpop.f32.mrb[0].mxu0
  %v1456 = vadd.f32 %v280, %v1455
  %v1457 = vpop.f32.mrb[0].mxu0
  %v1458 = vpop.f32.mrb[0].mxu0
  %v1459 = vadd.f32 %v280, %v1458
  %v1460 = vpop.f32.mrb[0].mxu0
  %1461 = vmatprep.mubr.bf16.mxu0 0
  %1462 = vmatmul.mubr.bf16.gmra.mrb[0].mxu0 %v974
  %v1463 = vpop.f32.mrb[0].mxu0
  %v1464 = vadd.f32 %v280, %v1463
  %v1465 = vpop.f32.mrb[0].mxu0
  %v1466 = vpop.f32.mrb[0].mxu0
  %v1467 = vadd.f32 %v280, %v1466
  %v1468 = vpop.f32.mrb[0].mxu0
  %1469 = vmatprep.mubr.bf16.mxu0 0
  %1470 = vmatmul.mubr.bf16.gmra.mrb[0].mxu0 %v977
  %v1471 = vpop.f32.mrb[0].mxu0
  %v1472 = vadd.f32 %v280, %v1471
  %v1473 = vpop.f32.mrb[0].mxu0
  %v1474 = vpop.f32.mrb[0].mxu0
  %v1475 = vadd.f32 %v280, %v1474
  %v1476 = vpop.f32.mrb[0].mxu0
  %1477 = vmatprep.mubr.bf16.mxu0 0
  %1478 = vmatmul.mubr.bf16.gmra.mrb[0].mxu0 %v980
  %v1479 = vpop.f32.mrb[0].mxu0
  %v1480 = vadd.f32 %v280, %v1479
  %v1481 = vpop.f32.mrb[0].mxu0
  %v1482 = vpop.f32.mrb[0].mxu0
  %v1483 = vadd.f32 %v280, %v1482
  %v1484 = vpop.f32.mrb[0].mxu0
  %1485 = vmatprep.mubr.bf16.mxu0 0
  %1486 = vmatmul.mubr.bf16.gmra.mrb[0].mxu0 %v983
  %v1487 = vpop.f32.mrb[0].mxu0
  %v1488 = vadd.f32 %v280, %v1487
  %v1489 = vpop.f32.mrb[0].mxu0
  %v1490 = vpop.f32.mrb[0].mxu0
  %v1491 = vadd.f32 %v280, %v1490
  %v1492 = vpop.f32.mrb[0].mxu0
  %1493 = vmatprep.mubr.bf16.mxu0 0
  %1494 = vmatmul.mubr.bf16.gmra.mrb[0].mxu0 %v986
  %v1495 = vpop.f32.mrb[0].mxu0
  %v1496 = vadd.f32 %v280, %v1495
  %v1497 = vpop.f32.mrb[0].mxu0
  %v1498 = vpop.f32.mrb[0].mxu0
  %v1499 = vadd.f32 %v280, %v1498
  %v1500 = vpop.f32.mrb[0].mxu0
  %1501 = vmatprep.mubr.bf16.mxu0 0
  %1502 = vmatmul.mubr.bf16.gmra.mrb[0].mxu0 %v989
  %v1503 = vpop.f32.mrb[0].mxu0
  %v1504 = vadd.f32 %v280, %v1503
  %v1505 = vpop.f32.mrb[0].mxu0
  %v1506 = vpop.f32.mrb[0].mxu0
  %v1507 = vadd.f32 %v280, %v1506
  %v1508 = vpop.f32.mrb[0].mxu0
  %1509 = vmatprep.mubr.bf16.mxu0 0
  %1510 = vmatmul.mubr.bf16.gmra.mrb[0].mxu0 %v992
  %v1511 = vpop.f32.mrb[0].mxu0
  %v1512 = vadd.f32 %v280, %v1511
  %v1513 = vpop.f32.mrb[0].mxu0
  %v1514 = vpop.f32.mrb[0].mxu0
  %v1515 = vadd.f32 %v280, %v1514
  %v1516 = vpop.f32.mrb[0].mxu0
  %1517 = vmatprep.mubr.bf16.mxu0 0
  %1518 = vmatmul.mubr.bf16.gmra.mrb[0].mxu0 %v995
  %v1519 = vpop.f32.mrb[0].mxu0
  %v1520 = vadd.f32 %v280, %v1519
  %v1521 = vpop.f32.mrb[0].mxu0
  %v1522 = vpop.f32.mrb[0].mxu0
  %v1523 = vadd.f32 %v280, %v1522
  %v1524 = vpop.f32.mrb[0].mxu0
  %1525 = vmatprep.mubr.bf16.mxu0 0
  %1526 = vmatmul.mubr.bf16.gmra.mrb[0].mxu0 %v998
  %v1527 = vpop.f32.mrb[0].mxu0
  %v1528 = vadd.f32 %v280, %v1527
  %v1529 = vpop.f32.mrb[0].mxu0
  %v1530 = vpop.f32.mrb[0].mxu0
  %v1531 = vadd.f32 %v280, %v1530
  %v1532 = vpop.f32.mrb[0].mxu0
  %1533 = vmatprep.mubr.bf16.mxu0 0
  %1534 = vmatmul.mubr.bf16.gmra.mrb[0].mxu0 %v1001
  %v1535 = vpop.f32.mrb[0].mxu0
  %v1536 = vadd.f32 %v280, %v1535
  %v1537 = vpop.f32.mrb[0].mxu0
  %v1538 = vpop.f32.mrb[0].mxu0
  %v1539 = vadd.f32 %v280, %v1538
  %v1540 = vpop.f32.mrb[0].mxu0
  %1541 = vmatprep.mubr.bf16.mxu0 0
  %1542 = vmatmul.mubr.bf16.gmra.mrb[0].mxu0 %v1004
  %v1543 = vpop.f32.mrb[0].mxu0
  %v1544 = vadd.f32 %v280, %v1543
  %v1545 = vpop.f32.mrb[0].mxu0
  %v1546 = vpop.f32.mrb[0].mxu0
  %v1547 = vadd.f32 %v280, %v1546
  %v1548 = vpop.f32.mrb[0].mxu0
  %1549 = vmatprep.mubr.bf16.mxu0 0
  %1550 = vmatmul.mubr.bf16.gmra.mrb[0].mxu0 %v1007
  %v1551 = vpop.f32.mrb[0].mxu0
  %v1552 = vadd.f32 %v280, %v1551
  %v1553 = vpop.f32.mrb[0].mxu0
  %v1554 = vpop.f32.mrb[0].mxu0
  %v1555 = vadd.f32 %v280, %v1554
  %v1556 = vpop.f32.mrb[0].mxu0
  %1557 = vmatprep.mubr.bf16.mxu0 0
  %1558 = vmatmul.mubr.bf16.gmra.mrb[0].mxu0 %v1010
  %v1559 = vpop.f32.mrb[0].mxu0
  %v1560 = vadd.f32 %v280, %v1559
  %v1561 = vpop.f32.mrb[0].mxu0
  %v1562 = vpop.f32.mrb[0].mxu0
  %v1563 = vadd.f32 %v280, %v1562
  %v1564 = vpop.f32.mrb[0].mxu0
  %1565 = vmatprep.mubr.bf16.mxu0 0
  %1566 = vmatmul.mubr.bf16.gmra.mrb[0].mxu0 %v1013
  %v1567 = vpop.f32.mrb[0].mxu0
  %v1568 = vadd.f32 %v280, %v1567
  %v1569 = vpop.f32.mrb[0].mxu0
  %v1570 = vpop.f32.mrb[0].mxu0
  %v1571 = vadd.f32 %v280, %v1570
  %v1572 = vpop.f32.mrb[0].mxu0
  %1573 = vmatprep.mubr.bf16.mxu0 0
  %1574 = vmatmul.mubr.bf16.gmra.mrb[0].mxu0 %v1016
  %v1575 = vpop.f32.mrb[0].mxu0
  %v1576 = vadd.f32 %v280, %v1575
  %v1577 = vpop.f32.mrb[0].mxu0
  %v1578 = vpop.f32.mrb[0].mxu0
  %v1579 = vadd.f32 %v280, %v1578
  %v1580 = vpop.f32.mrb[0].mxu0
  %1581 = vmatprep.mubr.bf16.mxu0 0
  %1582 = vmatmul.mubr.bf16.gmra.mrb[0].mxu0 %v1019
  %v1583 = vpop.f32.mrb[0].mxu0
  %v1584 = vadd.f32 %v280, %v1583
  %v1585 = vpop.f32.mrb[0].mxu0
  %v1586 = vpop.f32.mrb[0].mxu0
  %v1587 = vadd.f32 %v280, %v1586
  %v1588 = vpop.f32.mrb[0].mxu0
  %1589 = vmatprep.mubr.bf16.mxu0 0
  %1590 = vmatmul.mubr.bf16.gmra.mrb[0].mxu0 %v1022
  %v1591 = vpop.f32.mrb[0].mxu0
  %v1592 = vadd.f32 %v280, %v1591
  %v1593 = vpop.f32.mrb[0].mxu0
  %v1594 = vpop.f32.mrb[0].mxu0
  %v1595 = vadd.f32 %v280, %v1594
  %v1596 = vpop.f32.mrb[0].mxu0
  %1597 = vmatprep.mubr.bf16.mxu0 0
  %1598 = vmatmul.mubr.bf16.gmra.mrb[0].mxu0 %v1025
  %v1599 = vpop.f32.mrb[0].mxu0
  %v1600 = vadd.f32 %v280, %v1599
  %v1601 = vpop.f32.mrb[0].mxu0
  %v1602 = vpop.f32.mrb[0].mxu0
  %v1603 = vadd.f32 %v280, %v1602
  %v1604 = vpop.f32.mrb[0].mxu0
  %1605 = vmatprep.mubr.bf16.mxu0 0
  %1606 = vmatmul.mubr.bf16.gmra.mrb[0].mxu0 %v1028
  %v1607 = vpop.f32.mrb[0].mxu0
  %v1608 = vadd.f32 %v280, %v1607
  %v1609 = vpop.f32.mrb[0].mxu0
  %v1610 = vpop.f32.mrb[0].mxu0
  %v1611 = vadd.f32 %v280, %v1610
  %v1612 = vpop.f32.mrb[0].mxu0
  %1613 = vmatprep.mubr.bf16.mxu0 0
  %1614 = vmatmul.mubr.bf16.gmra.mrb[0].mxu0 %v1031
  %v1615 = vpop.f32.mrb[0].mxu0
  %v1616 = vadd.f32 %v280, %v1615
  %v1617 = vpop.f32.mrb[0].mxu0
  %v1618 = vpop.f32.mrb[0].mxu0
  %v1619 = vadd.f32 %v280, %v1618
  %v1620 = vpop.f32.mrb[0].mxu0
  %1621 = vmatprep.mubr.bf16.mxu0 0
  %1622 = vmatmul.mubr.bf16.gmra.mrb[0].mxu0 %v1034
  %v1623 = vpop.f32.mrb[0].mxu0
  %v1624 = vadd.f32 %v280, %v1623
  %v1625 = vpop.f32.mrb[0].mxu0
  %v1626 = vpop.f32.mrb[0].mxu0
  %v1627 = vadd.f32 %v280, %v1626
  %v1628 = vpop.f32.mrb[0].mxu0
  %1629 = vmatprep.mubr.bf16.mxu0 0
  %1630 = vmatmul.mubr.bf16.gmra.mrb[0].mxu0 %v1037
  %v1631 = vpop.f32.mrb[0].mxu0
  %v1632 = vadd.f32 %v280, %v1631
  %v1633 = vpop.f32.mrb[0].mxu0
  %v1634 = vpop.f32.mrb[0].mxu0
  %v1635 = vadd.f32 %v280, %v1634
  %v1636 = vpop.f32.mrb[0].mxu0
  %1637 = vmatprep.mubr.bf16.mxu0 0
  %1638 = vmatmul.mubr.bf16.gmra.mrb[0].mxu0 %v1040
  %v1639 = vpop.f32.mrb[0].mxu0
  %v1640 = vadd.f32 %v280, %v1639
  %v1641 = vpop.f32.mrb[0].mxu0
  %v1642 = vpop.f32.mrb[0].mxu0
  %v1643 = vadd.f32 %v280, %v1642
  %v1644 = vpop.f32.mrb[0].mxu0
  %1645 = vmatprep.mubr.bf16.mxu0 0
  %1646 = vmatmul.mubr.bf16.gmra.mrb[0].mxu0 %v1043
  %v1647 = vpop.f32.mrb[0].mxu0
  %v1648 = vadd.f32 %v280, %v1647
  %v1649 = vpop.f32.mrb[0].mxu0
  %v1650 = vpop.f32.mrb[0].mxu0
  %v1651 = vadd.f32 %v280, %v1650
  %v1652 = vpop.f32.mrb[0].mxu0
  %1653 = vmatprep.mubr.bf16.mxu0 0
  %1654 = vmatmul.mubr.bf16.gmra.mrb[0].mxu0 %v1046
  %v1655 = vpop.f32.mrb[0].mxu0
  %v1656 = vadd.f32 %v280, %v1655
  %v1657 = vpop.f32.mrb[0].mxu0
  %v1658 = vpop.f32.mrb[0].mxu0
  %v1659 = vadd.f32 %v280, %v1658
  %v1660 = vpop.f32.mrb[0].mxu0
  %1661 = vmatprep.mubr.bf16.mxu0 0
  %1662 = vmatmul.mubr.bf16.gmra.mrb[0].mxu0 %v1049
  %v1663 = vpop.f32.mrb[0].mxu0
  %v1664 = vadd.f32 %v280, %v1663
  %v1665 = vpop.f32.mrb[0].mxu0
  %v1666 = vpop.f32.mrb[0].mxu0
  %v1667 = vadd.f32 %v280, %v1666
  %v1668 = vpop.f32.mrb[0].mxu0
  %1669 = vmatprep.mubr.bf16.mxu0 0
  %1670 = vmatmul.mubr.bf16.gmra.mrb[0].mxu0 %v1052
  %v1671 = vpop.f32.mrb[0].mxu0
  %v1672 = vadd.f32 %v280, %v1671
  %v1673 = vpop.f32.mrb[0].mxu0
  %v1674 = vpop.f32.mrb[0].mxu0
  %v1675 = vadd.f32 %v280, %v1674
  %v1676 = vpop.f32.mrb[0].mxu0
  %1677 = vmatprep.mubr.bf16.mxu0 0
  %1678 = vmatmul.mubr.bf16.gmra.mrb[0].mxu0 %v1055
  %v1679 = vpop.f32.mrb[0].mxu0
  %v1680 = vadd.f32 %v280, %v1679
  %v1681 = vpop.f32.mrb[0].mxu0
  %v1682 = vpop.f32.mrb[0].mxu0
  %v1683 = vadd.f32 %v280, %v1682
  %v1684 = vpop.f32.mrb[0].mxu0
  %1685 = vmatprep.mubr.bf16.mxu0 0
  %1686 = vmatmul.mubr.bf16.gmra.mrb[0].mxu0 %v1058
  %v1687 = vpop.f32.mrb[0].mxu0
  %v1688 = vadd.f32 %v280, %v1687
  %v1689 = vpop.f32.mrb[0].mxu0
  %v1690 = vpop.f32.mrb[0].mxu0
  %v1691 = vadd.f32 %v280, %v1690
  %v1692 = vpop.f32.mrb[0].mxu0
  %1693 = vmatprep.mubr.bf16.mxu0 0
  %1694 = vmatmul.mubr.bf16.gmra.mrb[0].mxu0 %v1061
  %v1695 = vpop.f32.mrb[0].mxu0
  %v1696 = vadd.f32 %v280, %v1695
  %v1697 = vpop.f32.mrb[0].mxu0
  %v1698 = vpop.f32.mrb[0].mxu0
  %v1699 = vadd.f32 %v280, %v1698
  %v1700 = vpop.f32.mrb[0].mxu0
  %1701 = vmatprep.mubr.bf16.mxu0 0
  %1702 = vmatmul.mubr.bf16.gmra.mrb[0].mxu0 %v1064
  %v1703 = vpop.f32.mrb[0].mxu0
  %v1704 = vadd.f32 %v280, %v1703
  %v1705 = vpop.f32.mrb[0].mxu0
  %v1706 = vpop.f32.mrb[0].mxu0
  %v1707 = vadd.f32 %v280, %v1706
  %v1708 = vpop.f32.mrb[0].mxu0
  %1709 = vmatprep.mubr.bf16.mxu0 0
  %1710 = vmatmul.mubr.bf16.gmra.mrb[0].mxu0 %v1067
  %v1711 = vpop.f32.mrb[0].mxu0
  %v1712 = vadd.f32 %v280, %v1711
  %v1713 = vpop.f32.mrb[0].mxu0
  %v1714 = vpop.f32.mrb[0].mxu0
  %v1715 = vadd.f32 %v280, %v1714
  %v1716 = vpop.f32.mrb[0].mxu0
  %1717 = vmatprep.mubr.bf16.mxu0 0
  %1718 = vmatmul.mubr.bf16.gmra.mrb[0].mxu0 %v1070
  %v1719 = vpop.f32.mrb[0].mxu0
  %v1720 = vadd.f32 %v280, %v1719
  %v1721 = vpop.f32.mrb[0].mxu0
  %v1722 = vpop.f32.mrb[0].mxu0
  %v1723 = vadd.f32 %v280, %v1722
  %v1724 = vpop.f32.mrb[0].mxu0
  %1725 = vmatprep.mubr.bf16.mxu0 0
  %1726 = vmatmul.mubr.bf16.gmra.mrb[0].mxu0 %v1073
  %v1727 = vpop.f32.mrb[0].mxu0
  %v1728 = vadd.f32 %v280, %v1727
  %v1729 = vpop.f32.mrb[0].mxu0
  %v1730 = vpop.f32.mrb[0].mxu0
  %v1731 = vadd.f32 %v280, %v1730
  %v1732 = vpop.f32.mrb[0].mxu0
  %1733 = vmatprep.mubr.bf16.mxu0 0
  %1734 = vmatmul.mubr.bf16.gmra.mrb[0].mxu0 %v1076
  %v1735 = vpop.f32.mrb[0].mxu0
  %v1736 = vadd.f32 %v280, %v1735
  %v1737 = vpop.f32.mrb[0].mxu0
  %v1738 = vpop.f32.mrb[0].mxu0
  %v1739 = vadd.f32 %v280, %v1738
  %v1740 = vpop.f32.mrb[0].mxu0
  %1741 = vmatprep.mubr.bf16.mxu0 0
  %1742 = vmatmul.mubr.bf16.gmra.mrb[0].mxu0 %v1079
  %v1743 = vpop.f32.mrb[0].mxu0
  %v1744 = vadd.f32 %v280, %v1743
  %v1745 = vpop.f32.mrb[0].mxu0
  %v1746 = vpop.f32.mrb[0].mxu0
  %v1747 = vadd.f32 %v280, %v1746
  %v1748 = vpop.f32.mrb[0].mxu0
  %1749 = vmatprep.mubr.bf16.mxu0 0
  %1750 = vmatmul.mubr.bf16.gmra.mrb[0].mxu0 %v1082
  %v1751 = vpop.f32.mrb[0].mxu0
  %v1752 = vadd.f32 %v280, %v1751
  %v1753 = vpop.f32.mrb[0].mxu0
  %v1754 = vpop.f32.mrb[0].mxu0
  %v1755 = vadd.f32 %v280, %v1754
  %v1756 = vpop.f32.mrb[0].mxu0
  %1757 = vmatprep.mubr.bf16.mxu0 0
  %1758 = vmatmul.mubr.bf16.gmra.mrb[0].mxu0 %v1085
  %v1759 = vpop.f32.mrb[0].mxu0
  %v1760 = vadd.f32 %v280, %v1759
  %v1761 = vpop.f32.mrb[0].mxu0
  %v1762 = vpop.f32.mrb[0].mxu0
  %v1763 = vadd.f32 %v280, %v1762
  %v1764 = vpop.f32.mrb[0].mxu0
  %1765 = vmatprep.mubr.bf16.mxu0 0
  %1766 = vmatmul.mubr.bf16.gmra.mrb[0].mxu0 %v1088
  %v1767 = vpop.f32.mrb[0].mxu0
  %v1768 = vadd.f32 %v280, %v1767
  %v1769 = vpop.f32.mrb[0].mxu0
  %v1770 = vpop.f32.mrb[0].mxu0
  %v1771 = vadd.f32 %v280, %v1770
  %v1772 = vpop.f32.mrb[0].mxu0
  %1773 = vmatprep.mubr.bf16.mxu0 0
  %1774 = vmatmul.mubr.bf16.gmra.mrb[0].mxu0 %v1091
  %v1775 = vpop.f32.mrb[0].mxu0
  %v1776 = vadd.f32 %v280, %v1775
  %v1777 = vpop.f32.mrb[0].mxu0
  %v1778 = vpop.f32.mrb[0].mxu0
  %v1779 = vadd.f32 %v280, %v1778
  %v1780 = vpop.f32.mrb[0].mxu0
  %1781 = vmatprep.mubr.bf16.mxu0 0
  %1782 = vmatmul.mubr.bf16.gmra.mrb[0].mxu0 %v1094
  %v1783 = vpop.f32.mrb[0].mxu0
  %v1784 = vadd.f32 %v280, %v1783
  %v1785 = vpop.f32.mrb[0].mxu0
  %v1786 = vpop.f32.mrb[0].mxu0
  %v1787 = vadd.f32 %v280, %v1786
  %v1788 = vpop.f32.mrb[0].mxu0
  %1789 = vmatprep.mubr.bf16.mxu0 0
  %1790 = vmatmul.mubr.bf16.gmra.mrb[0].mxu0 %v1097
  %v1791 = vpop.f32.mrb[0].mxu0
  %v1792 = vadd.f32 %v280, %v1791
  %v1793 = vpop.f32.mrb[0].mxu0
  %v1794 = vpop.f32.mrb[0].mxu0
  %v1795 = vadd.f32 %v280, %v1794
  %v1796 = vpop.f32.mrb[0].mxu0
  %1797 = vmatprep.mubr.bf16.mxu0 0
  %1798 = vmatmul.mubr.bf16.gmra.mrb[0].mxu0 %v1100
  %v1799 = vpop.f32.mrb[0].mxu0
  %v1800 = vadd.f32 %v280, %v1799
  %v1801 = vpop.f32.mrb[0].mxu0
  %v1802 = vpop.f32.mrb[0].mxu0
  %v1803 = vadd.f32 %v280, %v1802
  %v1804 = vpop.f32.mrb[0].mxu0
  %1805 = vmatprep.mubr.bf16.mxu0 0
  %1806 = vmatmul.mubr.bf16.gmra.mrb[0].mxu0 %v1103
  %v1807 = vpop.f32.mrb[0].mxu0
  %v1808 = vadd.f32 %v280, %v1807
  %v1809 = vpop.f32.mrb[0].mxu0
  %v1810 = vpop.f32.mrb[0].mxu0
  %v1811 = vadd.f32 %v280, %v1810
  %v1812 = vpop.f32.mrb[0].mxu0
  %1813 = vmatprep.mubr.bf16.mxu0 0
  %1814 = vmatmul.mubr.bf16.gmra.mrb[0].mxu0 %v1106
  %v1815 = vpop.f32.mrb[0].mxu0
  %v1816 = vadd.f32 %v280, %v1815
  %v1817 = vpop.f32.mrb[0].mxu0
  %v1818 = vpop.f32.mrb[0].mxu0
  %v1819 = vadd.f32 %v280, %v1818
  %v1820 = vpop.f32.mrb[0].mxu0
  %1821 = vmatprep.mubr.bf16.mxu0 0
  %1822 = vmatmul.mubr.bf16.gmra.mrb[0].mxu0 %v1109
  %v1823 = vpop.f32.mrb[0].mxu0
  %v1824 = vadd.f32 %v280, %v1823
  %v1825 = vpop.f32.mrb[0].mxu0
  %v1826 = vpop.f32.mrb[0].mxu0
  %v1827 = vadd.f32 %v280, %v1826
  %v1828 = vpop.f32.mrb[0].mxu0
  %1829 = vmatprep.mubr.bf16.mxu0 0
  %1830 = vmatmul.mubr.bf16.gmra.mrb[0].mxu0 %v1112
  %v1831 = vpop.f32.mrb[0].mxu0
  %v1832 = vadd.f32 %v280, %v1831
  %v1833 = vpop.f32.mrb[0].mxu0
  %v1834 = vpop.f32.mrb[0].mxu0
  %v1835 = vadd.f32 %v280, %v1834
  %v1836 = vpop.f32.mrb[0].mxu0
  %1837 = vmatprep.mubr.bf16.mxu0 0
  %1838 = vmatmul.mubr.bf16.gmra.mrb[0].mxu0 %v1115
  %v1839 = vpop.f32.mrb[0].mxu0
  %v1840 = vadd.f32 %v280, %v1839
  %v1841 = vpop.f32.mrb[0].mxu0
  %v1842 = vpop.f32.mrb[0].mxu0
  %v1843 = vadd.f32 %v280, %v1842
  %v1844 = vpop.f32.mrb[0].mxu0
  %1845 = vmatprep.mubr.bf16.mxu0 0
  %1846 = vmatmul.mubr.bf16.gmra.mrb[0].mxu0 %v1118
  %v1847 = vpop.f32.mrb[0].mxu0
  %v1848 = vadd.f32 %v280, %v1847
  %v1849 = vpop.f32.mrb[0].mxu0
  %v1850 = vpop.f32.mrb[0].mxu0
  %v1851 = vadd.f32 %v280, %v1850
  %v1852 = vpop.f32.mrb[0].mxu0
  %1853 = vmatprep.mubr.bf16.mxu0 0
  %1854 = vmatmul.mubr.bf16.gmra.mrb[0].mxu0 %v1121
  %v1855 = vpop.f32.mrb[0].mxu0
  %v1856 = vadd.f32 %v280, %v1855
  %v1857 = vpop.f32.mrb[0].mxu0
  %v1858 = vpop.f32.mrb[0].mxu0
  %v1859 = vadd.f32 %v280, %v1858
  %v1860 = vpop.f32.mrb[0].mxu0
  %1861 = vmatprep.mubr.bf16.mxu0 0
  %1862 = vmatmul.mubr.bf16.gmra.mrb[0].mxu0 %v1124
  %v1863 = vpop.f32.mrb[0].mxu0
  %v1864 = vadd.f32 %v280, %v1863
  %v1865 = vpop.f32.mrb[0].mxu0
  %v1866 = vpop.f32.mrb[0].mxu0
  %v1867 = vadd.f32 %v280, %v1866
  %v1868 = vpop.f32.mrb[0].mxu0
  %1869 = vmatprep.mubr.bf16.mxu0 0
  %1870 = vmatmul.mubr.bf16.gmra.mrb[0].mxu0 %v1127
  %v1871 = vpop.f32.mrb[0].mxu0
  %v1872 = vadd.f32 %v280, %v1871
  %v1873 = vpop.f32.mrb[0].mxu0
  %v1874 = vpop.f32.mrb[0].mxu0
  %v1875 = vadd.f32 %v280, %v1874
  %v1876 = vpop.f32.mrb[0].mxu0
  %1877 = vmatprep.mubr.bf16.mxu0 0
  %1878 = vmatmul.mubr.bf16.gmra.mrb[0].mxu0 %v1130
  %v1879 = vpop.f32.mrb[0].mxu0
  %v1880 = vadd.f32 %v280, %v1879
  %v1881 = vpop.f32.mrb[0].mxu0
  %v1882 = vpop.f32.mrb[0].mxu0
  %v1883 = vadd.f32 %v280, %v1882
  %v1884 = vpop.f32.mrb[0].mxu0
  %1885 = vmatprep.mubr.bf16.mxu0 0
  %1886 = vmatmul.mubr.bf16.gmra.mrb[0].mxu0 %v1133
  %v1887 = vpop.f32.mrb[0].mxu0
  %v1888 = vadd.f32 %v280, %v1887
  %v1889 = vpop.f32.mrb[0].mxu0
  %v1890 = vpop.f32.mrb[0].mxu0
  %v1891 = vadd.f32 %v280, %v1890
  %v1892 = vpop.f32.mrb[0].mxu0
  %1893 = vmatprep.mubr.bf16.mxu0 0
  %1894 = vmatmul.mubr.bf16.gmra.mrb[0].mxu0 %v1136
  %v1895 = vpop.f32.mrb[0].mxu0
  %v1896 = vadd.f32 %v280, %v1895
  %v1897 = vpop.f32.mrb[0].mxu0
  %v1898 = vpop.f32.mrb[0].mxu0
  %v1899 = vadd.f32 %v280, %v1898
  %v1900 = vpop.f32.mrb[0].mxu0
  %1901 = vmatprep.mubr.bf16.mxu0 0
  %1902 = vmatmul.mubr.bf16.gmra.mrb[0].mxu0 %v1139
  %v1903 = vpop.f32.mrb[0].mxu0
  %v1904 = vadd.f32 %v280, %v1903
  %v1905 = vpop.f32.mrb[0].mxu0
  %v1906 = vpop.f32.mrb[0].mxu0
  %v1907 = vadd.f32 %v280, %v1906
  %v1908 = vpop.f32.mrb[0].mxu0
  %1909 = vmatprep.mubr.bf16.mxu0 0
  %1910 = vmatmul.mubr.bf16.gmra.mrb[0].mxu0 %v1142
  %v1911 = vpop.f32.mrb[0].mxu0
  %v1912 = vadd.f32 %v280, %v1911
  %v1913 = vpop.f32.mrb[0].mxu0
  %v1914 = vpop.f32.mrb[0].mxu0
  %v1915 = vadd.f32 %v280, %v1914
  %v1916 = vpop.f32.mrb[0].mxu0
  %1917 = vmatprep.mubr.bf16.mxu0 0
  %1918 = vmatmul.mubr.bf16.gmra.mrb[0].mxu0 %v1145
  %v1919 = vpop.f32.mrb[0].mxu0
  %v1920 = vadd.f32 %v280, %v1919
  %v1921 = vpop.f32.mrb[0].mxu0
  %v1922 = vpop.f32.mrb[0].mxu0
  %v1923 = vadd.f32 %v280, %v1922
  %v1924 = vpop.f32.mrb[0].mxu0
  %1925 = vmatprep.mubr.bf16.mxu0 0
  %1926 = vmatmul.mubr.bf16.gmra.mrb[0].mxu0 %v1148
  %v1927 = vpop.f32.mrb[0].mxu0
  %v1928 = vadd.f32 %v280, %v1927
  %v1929 = vpop.f32.mrb[0].mxu0
  %v1930 = vpop.f32.mrb[0].mxu0
  %v1931 = vadd.f32 %v280, %v1930
  %v1932 = vpop.f32.mrb[0].mxu0
  %1933 = vmatprep.mubr.bf16.mxu0 0
  %1934 = vmatmul.mubr.bf16.gmra.mrb[0].mxu0 %v1151
  %v1935 = vpop.f32.mrb[0].mxu0
  %v1936 = vadd.f32 %v280, %v1935
  %v1937 = vpop.f32.mrb[0].mxu0
  %v1938 = vpop.f32.mrb[0].mxu0
  %v1939 = vadd.f32 %v280, %v1938
  %v1940 = vpop.f32.mrb[0].mxu0
  %1941 = vmatprep.mubr.bf16.mxu0 0
  %1942 = vmatmul.mubr.bf16.gmra.mrb[0].mxu0 %v1154
  %v1943 = vpop.f32.mrb[0].mxu0
  %v1944 = vadd.f32 %v280, %v1943
  %v1945 = vpop.f32.mrb[0].mxu0
  %v1946 = vpop.f32.mrb[0].mxu0
  %v1947 = vadd.f32 %v280, %v1946
  %v1948 = vpop.f32.mrb[0].mxu0
  %1949 = vmatprep.mubr.bf16.mxu0 0
  %1950 = vmatmul.mubr.bf16.gmra.mrb[0].mxu0 %v1157
  %v1951 = vpop.f32.mrb[0].mxu0
  %v1952 = vadd.f32 %v280, %v1951
  %v1953 = vpop.f32.mrb[0].mxu0
  %v1954 = vpop.f32.mrb[0].mxu0
  %v1955 = vadd.f32 %v280, %v1954
  %v1956 = vpop.f32.mrb[0].mxu0
  %1957 = vmatprep.mubr.bf16.mxu0 0
  %1958 = vmatmul.mubr.bf16.gmra.mrb[0].mxu0 %v1160
  %v1959 = vpop.f32.mrb[0].mxu0
  %v1960 = vadd.f32 %v280, %v1959
  %v1961 = vpop.f32.mrb[0].mxu0
  %v1962 = vpop.f32.mrb[0].mxu0
  %v1963 = vadd.f32 %v280, %v1962
  %v1964 = vpop.f32.mrb[0].mxu0
  %1965 = vmatprep.mubr.bf16.mxu0 0
  %1966 = vmatmul.mubr.bf16.gmra.mrb[0].mxu0 %v1163
  %v1967 = vpop.f32.mrb[0].mxu0
  %v1968 = vadd.f32 %v280, %v1967
  %v1969 = vpop.f32.mrb[0].mxu0
  %v1970 = vpop.f32.mrb[0].mxu0
  %v1971 = vadd.f32 %v280, %v1970
  %v1972 = vpop.f32.mrb[0].mxu0
  %1973 = vmatprep.mubr.bf16.mxu0 0
  %1974 = vmatmul.mubr.bf16.gmra.mrb[0].mxu0 %v1166
  %v1975 = vpop.f32.mrb[0].mxu0
  %v1976 = vadd.f32 %v280, %v1975
  %v1977 = vpop.f32.mrb[0].mxu0
  %v1978 = vpop.f32.mrb[0].mxu0
  %v1979 = vadd.f32 %v280, %v1978
  %v1980 = vpop.f32.mrb[0].mxu0
  %1981 = vmatprep.mubr.bf16.mxu0 0
  %1982 = vmatmul.mubr.bf16.gmra.mrb[0].mxu0 %v1169
  %v1983 = vpop.f32.mrb[0].mxu0
  %v1984 = vadd.f32 %v280, %v1983
  %v1985 = vpop.f32.mrb[0].mxu0
  %v1986 = vpop.f32.mrb[0].mxu0
  %v1987 = vadd.f32 %v280, %v1986
  %v1988 = vpop.f32.mrb[0].mxu0
  %1989 = vmatprep.mubr.bf16.mxu0 0
  %1990 = vmatmul.mubr.bf16.gmra.mrb[0].mxu0 %v1172
  %v1991 = vpop.f32.mrb[0].mxu0
  %v1992 = vadd.f32 %v280, %v1991
  %v1993 = vpop.f32.mrb[0].mxu0
  %v1994 = vpop.f32.mrb[0].mxu0
  %v1995 = vadd.f32 %v280, %v1994
  %v1996 = vpop.f32.mrb[0].mxu0
  %1997 = vmatprep.mubr.bf16.mxu0 0
  %1998 = vmatmul.mubr.bf16.gmra.mrb[0].mxu0 %v1175
  %v1999 = vpop.f32.mrb[0].mxu0
  %v2000 = vadd.f32 %v280, %v1999
  %v2001 = vpop.f32.mrb[0].mxu0
  %v2002 = vpop.f32.mrb[0].mxu0
  %v2003 = vadd.f32 %v280, %v2002
  %v2004 = vpop.f32.mrb[0].mxu0
  %2005 = vmatprep.mubr.bf16.mxu0 0
  %2006 = vmatmul.mubr.bf16.gmra.mrb[0].mxu0 %v1178
  %v2007 = vpop.f32.mrb[0].mxu0
  %v2008 = vadd.f32 %v280, %v2007
  %v2009 = vpop.f32.mrb[0].mxu0
  %v2010 = vpop.f32.mrb[0].mxu0
  %v2011 = vadd.f32 %v280, %v2010
  %v2012 = vpop.f32.mrb[0].mxu0
  %2013 = vmatprep.mubr.bf16.mxu0 0
  %2014 = vmatmul.mubr.bf16.gmra.mrb[0].mxu0 %v1181
  %v2015 = vpop.f32.mrb[0].mxu0
  %v2016 = vadd.f32 %v280, %v2015
  %v2017 = vpop.f32.mrb[0].mxu0
  %v2018 = vpop.f32.mrb[0].mxu0
  %v2019 = vadd.f32 %v280, %v2018
  %v2020 = vpop.f32.mrb[0].mxu0
  %2021 = vmatprep.mubr.bf16.mxu0 0
  %2022 = vmatmul.mubr.bf16.gmra.mrb[0].mxu0 %v1184
  %v2023 = vpop.f32.mrb[0].mxu0
  %v2024 = vadd.f32 %v280, %v2023
  %v2025 = vpop.f32.mrb[0].mxu0
  %v2026 = vpop.f32.mrb[0].mxu0
  %v2027 = vadd.f32 %v280, %v2026
  %v2028 = vpop.f32.mrb[0].mxu0
  %2029 = vmatprep.mubr.bf16.mxu0 0
  %2030 = vmatmul.mubr.bf16.gmra.mrb[0].mxu0 %v1187
  %v2031 = vpop.f32.mrb[0].mxu0
  %v2032 = vadd.f32 %v280, %v2031
  %v2033 = vpop.f32.mrb[0].mxu0
  %v2034 = vpop.f32.mrb[0].mxu0
  %v2035 = vadd.f32 %v280, %v2034
  %v2036 = vpop.f32.mrb[0].mxu0
  %2037 = vmatprep.mubr.bf16.mxu0 0
  %2038 = vmatmul.mubr.bf16.gmra.mrb[0].mxu0 %v1190
  %v2039 = vpop.f32.mrb[0].mxu0
  %v2040 = vadd.f32 %v280, %v2039
  %v2041 = vpop.f32.mrb[0].mxu0
  %v2042 = vpop.f32.mrb[0].mxu0
  %v2043 = vadd.f32 %v280, %v2042
  %v2044 = vpop.f32.mrb[0].mxu0
  %2045 = vmatprep.mubr.bf16.mxu0 0
  %2046 = vmatmul.mubr.bf16.gmra.mrb[0].mxu0 %v1193
  %v2047 = vpop.f32.mrb[0].mxu0
  %v2048 = vadd.f32 %v280, %v2047
  %v2049 = vpop.f32.mrb[0].mxu0
  %v2050 = vpop.f32.mrb[0].mxu0
  %v2051 = vadd.f32 %v280, %v2050
  %v2052 = vpop.f32.mrb[0].mxu0
  %2053 = vmatprep.mubr.bf16.mxu0 0
  %2054 = vmatmul.mubr.bf16.gmra.mrb[0].mxu0 %v1196
  %v2055 = vpop.f32.mrb[0].mxu0
  %v2056 = vadd.f32 %v280, %v2055
  %v2057 = vpop.f32.mrb[0].mxu0
  %v2058 = vpop.f32.mrb[0].mxu0
  %v2059 = vadd.f32 %v280, %v2058
  %v2060 = vpop.f32.mrb[0].mxu0
  %2061 = vmatprep.mubr.bf16.mxu0 0
  %2062 = vmatmul.mubr.bf16.gmra.mrb[0].mxu0 %v1199
  %v2063 = vpop.f32.mrb[0].mxu0
  %v2064 = vadd.f32 %v280, %v2063
  %v2065 = vpop.f32.mrb[0].mxu0
  %v2066 = vpop.f32.mrb[0].mxu0
  %v2067 = vadd.f32 %v280, %v2066
  %v2068 = vpop.f32.mrb[0].mxu0
  %2069 = vmatprep.mubr.bf16.mxu0 0
  %2070 = vmatmul.mubr.bf16.gmra.mrb[0].mxu0 %v1202
  %v2071 = vpop.f32.mrb[0].mxu0
  %v2072 = vadd.f32 %v280, %v2071
  %v2073 = vpop.f32.mrb[0].mxu0
  %v2074 = vpop.f32.mrb[0].mxu0
  %v2075 = vadd.f32 %v280, %v2074
  %v2076 = vpop.f32.mrb[0].mxu0
  %2077 = vmatprep.mubr.bf16.mxu0 0
  %2078 = vmatmul.mubr.bf16.gmra.mrb[0].mxu0 %v1205
  %v2079 = vpop.f32.mrb[0].mxu0
  %v2080 = vadd.f32 %v280, %v2079
  %v2081 = vpop.f32.mrb[0].mxu0
  %v2082 = vpop.f32.mrb[0].mxu0
  %v2083 = vadd.f32 %v280, %v2082
  %v2084 = vpop.f32.mrb[0].mxu0
  %2085 = vmatprep.mubr.bf16.mxu0 0
  %2086 = vmatmul.mubr.bf16.gmra.mrb[0].mxu0 %v1208
  %v2087 = vpop.f32.mrb[0].mxu0
  %v2088 = vadd.f32 %v280, %v2087
  %v2089 = vpop.f32.mrb[0].mxu0
  %v2090 = vpop.f32.mrb[0].mxu0
  %v2091 = vadd.f32 %v280, %v2090
  %v2092 = vpop.f32.mrb[0].mxu0
  %2093 = vmatprep.mubr.bf16.mxu0 0
  %2094 = vmatmul.mubr.bf16.gmra.mrb[0].mxu0 %v1211
  %v2095 = vpop.f32.mrb[0].mxu0
  %v2096 = vadd.f32 %v280, %v2095
  %v2097 = vpop.f32.mrb[0].mxu0
  %v2098 = vpop.f32.mrb[0].mxu0
  %v2099 = vadd.f32 %v280, %v2098
  %v2100 = vpop.f32.mrb[0].mxu0
  %2101 = vmatprep.mubr.bf16.mxu0 0
  %2102 = vmatmul.mubr.bf16.gmra.mrb[0].mxu0 %v1214
  %v2103 = vpop.f32.mrb[0].mxu0
  %v2104 = vadd.f32 %v280, %v2103
  %v2105 = vpop.f32.mrb[0].mxu0
  %v2106 = vpop.f32.mrb[0].mxu0
  %v2107 = vadd.f32 %v280, %v2106
  %v2108 = vpop.f32.mrb[0].mxu0
  %2109 = vmatprep.mubr.bf16.mxu0 0
  %2110 = vmatmul.mubr.bf16.gmra.mrb[0].mxu0 %v1217
  %v2111 = vpop.f32.mrb[0].mxu0
  %v2112 = vadd.f32 %v280, %v2111
  %v2113 = vpop.f32.mrb[0].mxu0
  %v2114 = vpop.f32.mrb[0].mxu0
  %v2115 = vadd.f32 %v280, %v2114
  %v2116 = vpop.f32.mrb[0].mxu0
  %2117 = vmatprep.mubr.bf16.mxu0 0
  %2118 = vmatmul.mubr.bf16.gmra.mrb[0].mxu0 %v1220
  %v2119 = vpop.f32.mrb[0].mxu0
  %v2120 = vadd.f32 %v280, %v2119
  %v2121 = vpop.f32.mrb[0].mxu0
  %v2122 = vpop.f32.mrb[0].mxu0
  %v2123 = vadd.f32 %v280, %v2122
  %v2124 = vpop.f32.mrb[0].mxu0
  %2125 = vmatprep.mubr.bf16.mxu0 0
  %2126 = vmatmul.mubr.bf16.gmra.mrb[0].mxu0 %v1223
  %v2127 = vpop.f32.mrb[0].mxu0
  %v2128 = vadd.f32 %v280, %v2127
  %v2129 = vpop.f32.mrb[0].mxu0
  %v2130 = vpop.f32.mrb[0].mxu0
  %v2131 = vadd.f32 %v280, %v2130
  %v2132 = vpop.f32.mrb[0].mxu0
  %2133 = vmatprep.mubr.bf16.mxu0 0
  %2134 = vmatmul.mubr.bf16.gmra.mrb[0].mxu0 %v1226
  %v2135 = vpop.f32.mrb[0].mxu0
  %v2136 = vadd.f32 %v280, %v2135
  %v2137 = vpop.f32.mrb[0].mxu0
  %v2138 = vpop.f32.mrb[0].mxu0
  %v2139 = vadd.f32 %v280, %v2138
  %v2140 = vpop.f32.mrb[0].mxu0
  %2141 = vmatprep.mubr.bf16.mxu0 0
  %2142 = vmatmul.mubr.bf16.gmra.mrb[0].mxu0 %v1229
  %v2143 = vpop.f32.mrb[0].mxu0
  %v2144 = vadd.f32 %v280, %v2143
  %v2145 = vpop.f32.mrb[0].mxu0
  %v2146 = vpop.f32.mrb[0].mxu0
  %v2147 = vadd.f32 %v280, %v2146
  %v2148 = vpop.f32.mrb[0].mxu0
  %2149 = vmatprep.mubr.bf16.mxu0 0
  %2150 = vmatmul.mubr.bf16.gmra.mrb[0].mxu0 %v1232
  %v2151 = vpop.f32.mrb[0].mxu0
  %v2152 = vadd.f32 %v280, %v2151
  %v2153 = vpop.f32.mrb[0].mxu0
  %v2154 = vpop.f32.mrb[0].mxu0
  %v2155 = vadd.f32 %v280, %v2154
  %v2156 = vpop.f32.mrb[0].mxu0
  %2157 = vmatprep.mubr.bf16.mxu0 0
  %2158 = vmatmul.mubr.bf16.gmra.mrb[0].mxu0 %v1235
  %v2159 = vpop.f32.mrb[0].mxu0
  %v2160 = vadd.f32 %v280, %v2159
  %v2161 = vpop.f32.mrb[0].mxu0
  %v2162 = vpop.f32.mrb[0].mxu0
  %v2163 = vadd.f32 %v280, %v2162
  %v2164 = vpop.f32.mrb[0].mxu0
  %2165 = vmatprep.mubr.bf16.mxu0 0
  %2166 = vmatmul.mubr.bf16.gmra.mrb[0].mxu0 %v1238
  %v2167 = vpop.f32.mrb[0].mxu0
  %v2168 = vadd.f32 %v280, %v2167
  %v2169 = vpop.f32.mrb[0].mxu0
  %v2170 = vpop.f32.mrb[0].mxu0
  %v2171 = vadd.f32 %v280, %v2170
  %v2172 = vpop.f32.mrb[0].mxu0
  %2173 = vmatprep.mubr.bf16.mxu0 0
  %2174 = vmatmul.mubr.bf16.gmra.mrb[0].mxu0 %v1241
  %v2175 = vpop.f32.mrb[0].mxu0
  %v2176 = vadd.f32 %v280, %v2175
  %v2177 = vpop.f32.mrb[0].mxu0
  %v2178 = vpop.f32.mrb[0].mxu0
  %v2179 = vadd.f32 %v280, %v2178
  %v2180 = vpop.f32.mrb[0].mxu0
  %2181 = vmatprep.mubr.bf16.mxu0 0
  %2182 = vmatmul.mubr.bf16.gmra.mrb[0].mxu0 %v1244
  %v2183 = vpop.f32.mrb[0].mxu0
  %v2184 = vadd.f32 %v280, %v2183
  %v2185 = vpop.f32.mrb[0].mxu0
  %v2186 = vpop.f32.mrb[0].mxu0
  %v2187 = vadd.f32 %v280, %v2186
  %v2188 = vpop.f32.mrb[0].mxu0
  %2189 = vmatprep.mubr.bf16.mxu0 0
  %2190 = vmatmul.mubr.bf16.gmra.mrb[0].mxu0 %v1247
  %v2191 = vpop.f32.mrb[0].mxu0
  %v2192 = vadd.f32 %v280, %v2191
  %v2193 = vpop.f32.mrb[0].mxu0
  %v2194 = vpop.f32.mrb[0].mxu0
  %v2195 = vadd.f32 %v280, %v2194
  %v2196 = vpop.f32.mrb[0].mxu0
  %2197 = vmatprep.mubr.bf16.mxu0 0
  %2198 = vmatmul.mubr.bf16.gmra.mrb[0].mxu0 %v1250
  %v2199 = vpop.f32.mrb[0].mxu0
  %v2200 = vadd.f32 %v280, %v2199
  %v2201 = vpop.f32.mrb[0].mxu0
  %v2202 = vpop.f32.mrb[0].mxu0
  %v2203 = vadd.f32 %v280, %v2202
  %v2204 = vpop.f32.mrb[0].mxu0
  %2205 = vmatprep.mubr.bf16.mxu0 0
  %2206 = vmatmul.mubr.bf16.gmra.mrb[0].mxu0 %v1253
  %v2207 = vpop.f32.mrb[0].mxu0
  %v2208 = vadd.f32 %v280, %v2207
  %v2209 = vpop.f32.mrb[0].mxu0
  %v2210 = vpop.f32.mrb[0].mxu0
  %v2211 = vadd.f32 %v280, %v2210
  %v2212 = vpop.f32.mrb[0].mxu0
  %2213 = vmatprep.mubr.bf16.mxu0 0
  %2214 = vmatmul.mubr.bf16.gmra.mrb[0].mxu0 %v1256
  %v2215 = vpop.f32.mrb[0].mxu0
  %v2216 = vadd.f32 %v280, %v2215
  %v2217 = vpop.f32.mrb[0].mxu0
  %v2218 = vpop.f32.mrb[0].mxu0
  %v2219 = vadd.f32 %v280, %v2218
  %v2220 = vpop.f32.mrb[0].mxu0
  %2221 = vmatprep.mubr.bf16.mxu0 0
  %2222 = vmatmul.mubr.bf16.gmra.mrb[0].mxu0 %v1259
  %v2223 = vpop.f32.mrb[0].mxu0
  %v2224 = vadd.f32 %v280, %v2223
  %v2225 = vpop.f32.mrb[0].mxu0
  %v2226 = vpop.f32.mrb[0].mxu0
  %v2227 = vadd.f32 %v280, %v2226
  %v2228 = vpop.f32.mrb[0].mxu0
  %2229 = vmatprep.mubr.bf16.mxu0 0
  %2230 = vmatmul.mubr.bf16.gmra.mrb[0].mxu0 %v1262
  %v2231 = vpop.f32.mrb[0].mxu0
  %v2232 = vadd.f32 %v280, %v2231
  %v2233 = vpop.f32.mrb[0].mxu0
  %v2234 = vpop.f32.mrb[0].mxu0
  %v2235 = vadd.f32 %v280, %v2234
  %v2236 = vpop.f32.mrb[0].mxu0
  %2237 = vmatprep.mubr.bf16.mxu0 0
  %2238 = vmatmul.mubr.bf16.gmra.mrb[0].mxu0 %v1265
  %v2239 = vpop.f32.mrb[0].mxu0
  %v2240 = vadd.f32 %v280, %v2239
  %v2241 = vpop.f32.mrb[0].mxu0
  %v2242 = vpop.f32.mrb[0].mxu0
  %v2243 = vadd.f32 %v280, %v2242
  %v2244 = vpop.f32.mrb[0].mxu0
  %2245 = vmatprep.mubr.bf16.mxu0 0
  %2246 = vmatmul.mubr.bf16.gmra.mrb[0].mxu0 %v1268
  %v2247 = vpop.f32.mrb[0].mxu0
  %v2248 = vadd.f32 %v280, %v2247
  %v2249 = vpop.f32.mrb[0].mxu0
  %v2250 = vpop.f32.mrb[0].mxu0
  %v2251 = vadd.f32 %v280, %v2250
  %v2252 = vpop.f32.mrb[0].mxu0
  %2253 = vmatprep.mubr.bf16.mxu0 0
  %2254 = vmatmul.mubr.bf16.gmra.mrb[0].mxu0 %v1271
  %v2255 = vpop.f32.mrb[0].mxu0
  %v2256 = vadd.f32 %v280, %v2255
  %v2257 = vpop.f32.mrb[0].mxu0
  %v2258 = vpop.f32.mrb[0].mxu0
  %v2259 = vadd.f32 %v280, %v2258
  %v2260 = vpop.f32.mrb[0].mxu0
  %2261 = vmatprep.mubr.bf16.mxu0 0
  %2262 = vmatmul.mubr.bf16.gmra.mrb[0].mxu0 %v1274
  %v2263 = vpop.f32.mrb[0].mxu0
  %v2264 = vadd.f32 %v280, %v2263
  %v2265 = vpop.f32.mrb[0].mxu0
  %v2266 = vpop.f32.mrb[0].mxu0
  %v2267 = vadd.f32 %v280, %v2266
  %v2268 = vpop.f32.mrb[0].mxu0
  %2269 = vmatprep.mubr.bf16.mxu0 0
  %2270 = vmatmul.mubr.bf16.gmra.mrb[0].mxu0 %v1277
  %v2271 = vpop.f32.mrb[0].mxu0
  %v2272 = vadd.f32 %v280, %v2271
  %v2273 = vpop.f32.mrb[0].mxu0
  %v2274 = vpop.f32.mrb[0].mxu0
  %v2275 = vadd.f32 %v280, %v2274
  %v2276 = vpop.f32.mrb[0].mxu0
  %2277 = vmatprep.mubr.bf16.mxu0 0
  %2278 = vmatmul.mubr.bf16.gmra.mrb[0].mxu0 %v1280
  %v2279 = vpop.f32.mrb[0].mxu0
  %v2280 = vadd.f32 %v280, %v2279
  %v2281 = vpop.f32.mrb[0].mxu0
  %v2282 = vpop.f32.mrb[0].mxu0
  %v2283 = vadd.f32 %v280, %v2282
  %v2284 = vpop.f32.mrb[0].mxu0
  %2285 = vmatprep.mubr.bf16.mxu0 0
  %2286 = vmatmul.mubr.bf16.gmra.mrb[0].mxu0 %v1283
  %v2287 = vpop.f32.mrb[0].mxu0
  %v2288 = vadd.f32 %v280, %v2287
  %v2289 = vpop.f32.mrb[0].mxu0
  %v2290 = vpop.f32.mrb[0].mxu0
  %v2291 = vadd.f32 %v280, %v2290
  %v2292 = vpop.f32.mrb[0].mxu0
  %2293 = vmatprep.mubr.bf16.mxu0 0
  %2294 = vmatmul.mubr.bf16.gmra.mrb[0].mxu0 %v1286
  %v2295 = vpop.f32.mrb[0].mxu0
  %v2296 = vadd.f32 %v280, %v2295
  %v2297 = vpop.f32.mrb[0].mxu0
  %v2298 = vpop.f32.mrb[0].mxu0
  %v2299 = vadd.f32 %v280, %v2298
  %v2300 = vpop.f32.mrb[0].mxu0
  %2301 = vmatprep.mubr.bf16.mxu0 0
  %2302 = vmatmul.mubr.bf16.gmra.mrb[0].mxu0 %v1289
  %v2303 = vpop.f32.mrb[0].mxu0
  %v2304 = vadd.f32 %v280, %v2303
  %v2305 = vpop.f32.mrb[0].mxu0
  %v2306 = vpop.f32.mrb[0].mxu0
  %v2307 = vadd.f32 %v280, %v2306
  %v2308 = vpop.f32.mrb[0].mxu0
  %2309 = vmatprep.mubr.bf16.mxu0 0
  %2310 = vmatmul.mubr.bf16.gmra.mrb[0].mxu0 %v1292
  %v2311 = vpop.f32.mrb[0].mxu0
  %v2312 = vadd.f32 %v280, %v2311
  %v2313 = vpop.f32.mrb[0].mxu0
  %v2314 = vpop.f32.mrb[0].mxu0
  %v2315 = vadd.f32 %v280, %v2314
  %v2316 = vpop.f32.mrb[0].mxu0
  %2317 = vmatprep.mubr.bf16.mxu0 0
  %2318 = vmatmul.mubr.bf16.gmra.mrb[0].mxu0 %v1295
  %v2319 = vpop.f32.mrb[0].mxu0
  %v2320 = vadd.f32 %v280, %v2319
  %v2321 = vpop.f32.mrb[0].mxu0
  %v2322 = vpop.f32.mrb[0].mxu0
  %v2323 = vadd.f32 %v280, %v2322
  %v2324 = vpop.f32.mrb[0].mxu0
  %2325 = vmatprep.mubr.bf16.mxu0 0
  %2326 = vmatmul.mubr.bf16.gmra.mrb[0].mxu0 %v1298
  %v2327 = vpop.f32.mrb[0].mxu0
  %v2328 = vadd.f32 %v280, %v2327
  %v2329 = vpop.f32.mrb[0].mxu0
  %v2330 = vpop.f32.mrb[0].mxu0
  %v2331 = vadd.f32 %v280, %v2330
  %v2332 = vpop.f32.mrb[0].mxu0
  %2333 = vmatprep.mubr.bf16.mxu0 0
  %2334 = vmatmul.mubr.bf16.gmra.mrb[0].mxu0 %v1301
  %v2335 = vpop.f32.mrb[0].mxu0
  %v2336 = vadd.f32 %v280, %v2335
  %v2337 = vpop.f32.mrb[0].mxu0
  %v2338 = vpop.f32.mrb[0].mxu0
  %v2339 = vadd.f32 %v280, %v2338
  %v2340 = vpop.f32.mrb[0].mxu0
  %2341 = vmatprep.mubr.bf16.mxu0 0
  %2342 = vmatmul.mubr.bf16.gmra.mrb[0].mxu0 %v1304
  %v2343 = vpop.f32.mrb[0].mxu0
  %v2344 = vadd.f32 %v280, %v2343
  %v2345 = vpop.f32.mrb[0].mxu0
  %v2346 = vpop.f32.mrb[0].mxu0
  %v2347 = vadd.f32 %v280, %v2346
  %v2348 = vpop.f32.mrb[0].mxu0
  %2349 = vmatprep.mubr.bf16.mxu0 0
  %2350 = vmatmul.mubr.bf16.gmra.mrb[0].mxu0 %v1307
  %v2351 = vpop.f32.mrb[0].mxu0
  %v2352 = vadd.f32 %v280, %v2351
  %v2353 = vpop.f32.mrb[0].mxu0
  %v2354 = vpop.f32.mrb[0].mxu0
  %v2355 = vadd.f32 %v280, %v2354
  %v2356 = vpop.f32.mrb[0].mxu0
  %2357 = vmatprep.mubr.bf16.mxu0 0
  %2358 = vmatmul.mubr.bf16.gmra.mrb[0].mxu0 %v1310
  %v2359 = vpop.f32.mrb[0].mxu0
  %v2360 = vadd.f32 %v280, %v2359
  %v2361 = vpop.f32.mrb[0].mxu0
  %v2362 = vpop.f32.mrb[0].mxu0
  %v2363 = vadd.f32 %v280, %v2362
  %v2364 = vpop.f32.mrb[0].mxu0
  %2365 = vmatprep.mubr.bf16.mxu0 0
  %2366 = vmatmul.mubr.bf16.gmra.mrb[0].mxu0 %v1313
  %v2367 = vpop.f32.mrb[0].mxu0
  %v2368 = vadd.f32 %v280, %v2367
  %v2369 = vpop.f32.mrb[0].mxu0
  %v2370 = vpop.f32.mrb[0].mxu0
  %v2371 = vadd.f32 %v280, %v2370
  %v2372 = vpop.f32.mrb[0].mxu0
  %2373 = vmatprep.mubr.bf16.mxu0 0
  %2374 = vmatmul.mubr.bf16.gmra.mrb[0].mxu0 %v1316
  %v2375 = vpop.f32.mrb[0].mxu0
  %v2376 = vadd.f32 %v280, %v2375
  %v2377 = vpop.f32.mrb[0].mxu0
  %v2378 = vpop.f32.mrb[0].mxu0
  %v2379 = vadd.f32 %v280, %v2378
  %v2380 = vpop.f32.mrb[0].mxu0
  %2381 = vdwg.mxu0
  %v2382 = vmax.f32 %v1360, 0.0
  %v2383 = vmax.f32 %v1363, 0.0
  %v2384 = vmax.f32 %v1368, 0.0
  %v2385 = vmax.f32 %v1371, 0.0
  %v2386 = vmax.f32 %v1376, 0.0
  %v2387 = vmax.f32 %v1379, 0.0
  %v2388 = vmax.f32 %v1384, 0.0
  %v2389 = vmax.f32 %v1387, 0.0
  %v2390 = vmax.f32 %v1392, 0.0
  %v2391 = vmax.f32 %v1395, 0.0
  %v2392 = vmax.f32 %v1400, 0.0
  %v2393 = vmax.f32 %v1403, 0.0
  %v2394 = vmax.f32 %v1408, 0.0
  %v2395 = vmax.f32 %v1411, 0.0
  %v2396 = vmax.f32 %v1416, 0.0
  %v2397 = vmax.f32 %v1419, 0.0
  %v2398 = vmax.f32 %v1424, 0.0
  %v2399 = vmax.f32 %v1427, 0.0
  %v2400 = vmax.f32 %v1432, 0.0
  %v2401 = vmax.f32 %v1435, 0.0
  %v2402 = vmax.f32 %v1440, 0.0
  %v2403 = vmax.f32 %v1443, 0.0
  %v2404 = vmax.f32 %v1448, 0.0
  %v2405 = vmax.f32 %v1451, 0.0
  %v2406 = vmax.f32 %v1456, 0.0
  %v2407 = vmax.f32 %v1459, 0.0
  %v2408 = vmax.f32 %v1464, 0.0
  %v2409 = vmax.f32 %v1467, 0.0
  %v2410 = vmax.f32 %v1472, 0.0
  %v2411 = vmax.f32 %v1475, 0.0
  %v2412 = vmax.f32 %v1480, 0.0
  %v2413 = vmax.f32 %v1483, 0.0
  %v2414 = vmax.f32 %v1488, 0.0
  %v2415 = vmax.f32 %v1491, 0.0
  %v2416 = vmax.f32 %v1496, 0.0
  %v2417 = vmax.f32 %v1499, 0.0
  %v2418 = vmax.f32 %v1504, 0.0
  %v2419 = vmax.f32 %v1507, 0.0
  %v2420 = vmax.f32 %v1512, 0.0
  %v2421 = vmax.f32 %v1515, 0.0
  %v2422 = vmax.f32 %v1520, 0.0
  %v2423 = vmax.f32 %v1523, 0.0
  %v2424 = vmax.f32 %v1528, 0.0
  %v2425 = vmax.f32 %v1531, 0.0
  %v2426 = vmax.f32 %v1536, 0.0
  %v2427 = vmax.f32 %v1539, 0.0
  %v2428 = vmax.f32 %v1544, 0.0
  %v2429 = vmax.f32 %v1547, 0.0
  %v2430 = vmax.f32 %v1552, 0.0
  %v2431 = vmax.f32 %v1555, 0.0
  %v2432 = vmax.f32 %v1560, 0.0
  %v2433 = vmax.f32 %v1563, 0.0
  %v2434 = vmax.f32 %v1568, 0.0
  %v2435 = vmax.f32 %v1571, 0.0
  %v2436 = vmax.f32 %v1576, 0.0
  %v2437 = vmax.f32 %v1579, 0.0
  %v2438 = vmax.f32 %v1584, 0.0
  %v2439 = vmax.f32 %v1587, 0.0
  %v2440 = vmax.f32 %v1592, 0.0
  %v2441 = vmax.f32 %v1595, 0.0
  %v2442 = vmax.f32 %v1600, 0.0
  %v2443 = vmax.f32 %v1603, 0.0
  %v2444 = vmax.f32 %v1608, 0.0
  %v2445 = vmax.f32 %v1611, 0.0
  %v2446 = vmax.f32 %v1616, 0.0
  %v2447 = vmax.f32 %v1619, 0.0
  %v2448 = vmax.f32 %v1624, 0.0
  %v2449 = vmax.f32 %v1627, 0.0
  %v2450 = vmax.f32 %v1632, 0.0
  %v2451 = vmax.f32 %v1635, 0.0
  %v2452 = vmax.f32 %v1640, 0.0
  %v2453 = vmax.f32 %v1643, 0.0
  %v2454 = vmax.f32 %v1648, 0.0
  %v2455 = vmax.f32 %v1651, 0.0
  %v2456 = vmax.f32 %v1656, 0.0
  %v2457 = vmax.f32 %v1659, 0.0
  %v2458 = vmax.f32 %v1664, 0.0
  %v2459 = vmax.f32 %v1667, 0.0
  %v2460 = vmax.f32 %v1672, 0.0
  %v2461 = vmax.f32 %v1675, 0.0
  %v2462 = vmax.f32 %v1680, 0.0
  %v2463 = vmax.f32 %v1683, 0.0
  %v2464 = vmax.f32 %v1688, 0.0
  %v2465 = vmax.f32 %v1691, 0.0
  %v2466 = vmax.f32 %v1696, 0.0
  %v2467 = vmax.f32 %v1699, 0.0
  %v2468 = vmax.f32 %v1704, 0.0
  %v2469 = vmax.f32 %v1707, 0.0
  %v2470 = vmax.f32 %v1712, 0.0
  %v2471 = vmax.f32 %v1715, 0.0
  %v2472 = vmax.f32 %v1720, 0.0
  %v2473 = vmax.f32 %v1723, 0.0
  %v2474 = vmax.f32 %v1728, 0.0
  %v2475 = vmax.f32 %v1731, 0.0
  %v2476 = vmax.f32 %v1736, 0.0
  %v2477 = vmax.f32 %v1739, 0.0
  %v2478 = vmax.f32 %v1744, 0.0
  %v2479 = vmax.f32 %v1747, 0.0
  %v2480 = vmax.f32 %v1752, 0.0
  %v2481 = vmax.f32 %v1755, 0.0
  %v2482 = vmax.f32 %v1760, 0.0
  %v2483 = vmax.f32 %v1763, 0.0
  %v2484 = vmax.f32 %v1768, 0.0
  %v2485 = vmax.f32 %v1771, 0.0
  %v2486 = vmax.f32 %v1776, 0.0
  %v2487 = vmax.f32 %v1779, 0.0
  %v2488 = vmax.f32 %v1784, 0.0
  %v2489 = vmax.f32 %v1787, 0.0
  %v2490 = vmax.f32 %v1792, 0.0
  %v2491 = vmax.f32 %v1795, 0.0
  %v2492 = vmax.f32 %v1800, 0.0
  %v2493 = vmax.f32 %v1803, 0.0
  %v2494 = vmax.f32 %v1808, 0.0
  %v2495 = vmax.f32 %v1811, 0.0
  %v2496 = vmax.f32 %v1816, 0.0
  %v2497 = vmax.f32 %v1819, 0.0
  %v2498 = vmax.f32 %v1824, 0.0
  %v2499 = vmax.f32 %v1827, 0.0
  %v2500 = vmax.f32 %v1832, 0.0
  %v2501 = vmax.f32 %v1835, 0.0
  %v2502 = vmax.f32 %v1840, 0.0
  %v2503 = vmax.f32 %v1843, 0.0
  %v2504 = vmax.f32 %v1848, 0.0
  %v2505 = vmax.f32 %v1851, 0.0
  %v2506 = vmax.f32 %v1856, 0.0
  %v2507 = vmax.f32 %v1859, 0.0
  %v2508 = vmax.f32 %v1864, 0.0
  %v2509 = vmax.f32 %v1867, 0.0
  %v2510 = vmax.f32 %v1872, 0.0
  %v2511 = vmax.f32 %v1875, 0.0
  %v2512 = vmax.f32 %v1880, 0.0
  %v2513 = vmax.f32 %v1883, 0.0
  %v2514 = vmax.f32 %v1888, 0.0
  %v2515 = vmax.f32 %v1891, 0.0
  %v2516 = vmax.f32 %v1896, 0.0
  %v2517 = vmax.f32 %v1899, 0.0
  %v2518 = vmax.f32 %v1904, 0.0
  %v2519 = vmax.f32 %v1907, 0.0
  %v2520 = vmax.f32 %v1912, 0.0
  %v2521 = vmax.f32 %v1915, 0.0
  %v2522 = vmax.f32 %v1920, 0.0
  %v2523 = vmax.f32 %v1923, 0.0
  %v2524 = vmax.f32 %v1928, 0.0
  %v2525 = vmax.f32 %v1931, 0.0
  %v2526 = vmax.f32 %v1936, 0.0
  %v2527 = vmax.f32 %v1939, 0.0
  %v2528 = vmax.f32 %v1944, 0.0
  %v2529 = vmax.f32 %v1947, 0.0
  %v2530 = vmax.f32 %v1952, 0.0
  %v2531 = vmax.f32 %v1955, 0.0
  %v2532 = vmax.f32 %v1960, 0.0
  %v2533 = vmax.f32 %v1963, 0.0
  %v2534 = vmax.f32 %v1968, 0.0
  %v2535 = vmax.f32 %v1971, 0.0
  %v2536 = vmax.f32 %v1976, 0.0
  %v2537 = vmax.f32 %v1979, 0.0
  %v2538 = vmax.f32 %v1984, 0.0
  %v2539 = vmax.f32 %v1987, 0.0
  %v2540 = vmax.f32 %v1992, 0.0
  %v2541 = vmax.f32 %v1995, 0.0
  %v2542 = vmax.f32 %v2000, 0.0
  %v2543 = vmax.f32 %v2003, 0.0
  %v2544 = vmax.f32 %v2008, 0.0
  %v2545 = vmax.f32 %v2011, 0.0
  %v2546 = vmax.f32 %v2016, 0.0
  %v2547 = vmax.f32 %v2019, 0.0
  %v2548 = vmax.f32 %v2024, 0.0
  %v2549 = vmax.f32 %v2027, 0.0
  %v2550 = vmax.f32 %v2032, 0.0
  %v2551 = vmax.f32 %v2035, 0.0
  %v2552 = vmax.f32 %v2040, 0.0
  %v2553 = vmax.f32 %v2043, 0.0
  %v2554 = vmax.f32 %v2048, 0.0
  %v2555 = vmax.f32 %v2051, 0.0
  %v2556 = vmax.f32 %v2056, 0.0
  %v2557 = vmax.f32 %v2059, 0.0
  %v2558 = vmax.f32 %v2064, 0.0
  %v2559 = vmax.f32 %v2067, 0.0
  %v2560 = vmax.f32 %v2072, 0.0
  %v2561 = vmax.f32 %v2075, 0.0
  %v2562 = vmax.f32 %v2080, 0.0
  %v2563 = vmax.f32 %v2083, 0.0
  %v2564 = vmax.f32 %v2088, 0.0
  %v2565 = vmax.f32 %v2091, 0.0
  %v2566 = vmax.f32 %v2096, 0.0
  %v2567 = vmax.f32 %v2099, 0.0
  %v2568 = vmax.f32 %v2104, 0.0
  %v2569 = vmax.f32 %v2107, 0.0
  %v2570 = vmax.f32 %v2112, 0.0
  %v2571 = vmax.f32 %v2115, 0.0
  %v2572 = vmax.f32 %v2120, 0.0
  %v2573 = vmax.f32 %v2123, 0.0
  %v2574 = vmax.f32 %v2128, 0.0
  %v2575 = vmax.f32 %v2131, 0.0
  %v2576 = vmax.f32 %v2136, 0.0
  %v2577 = vmax.f32 %v2139, 0.0
  %v2578 = vmax.f32 %v2144, 0.0
  %v2579 = vmax.f32 %v2147, 0.0
  %v2580 = vmax.f32 %v2152, 0.0
  %v2581 = vmax.f32 %v2155, 0.0
  %v2582 = vmax.f32 %v2160, 0.0
  %v2583 = vmax.f32 %v2163, 0.0
  %v2584 = vmax.f32 %v2168, 0.0
  %v2585 = vmax.f32 %v2171, 0.0
  %v2586 = vmax.f32 %v2176, 0.0
  %v2587 = vmax.f32 %v2179, 0.0
  %v2588 = vmax.f32 %v2184, 0.0
  %v2589 = vmax.f32 %v2187, 0.0
  %v2590 = vmax.f32 %v2192, 0.0
  %v2591 = vmax.f32 %v2195, 0.0
  %v2592 = vmax.f32 %v2200, 0.0
  %v2593 = vmax.f32 %v2203, 0.0
  %v2594 = vmax.f32 %v2208, 0.0
  %v2595 = vmax.f32 %v2211, 0.0
  %v2596 = vmax.f32 %v2216, 0.0
  %v2597 = vmax.f32 %v2219, 0.0
  %v2598 = vmax.f32 %v2224, 0.0
  %v2599 = vmax.f32 %v2227, 0.0
  %v2600 = vmax.f32 %v2232, 0.0
  %v2601 = vmax.f32 %v2235, 0.0
  %v2602 = vmax.f32 %v2240, 0.0
  %v2603 = vmax.f32 %v2243, 0.0
  %v2604 = vmax.f32 %v2248, 0.0
  %v2605 = vmax.f32 %v2251, 0.0
  %v2606 = vmax.f32 %v2256, 0.0
  %v2607 = vmax.f32 %v2259, 0.0
  %v2608 = vmax.f32 %v2264, 0.0
  %v2609 = vmax.f32 %v2267, 0.0
  %v2610 = vmax.f32 %v2272, 0.0
  %v2611 = vmax.f32 %v2275, 0.0
  %v2612 = vmax.f32 %v2280, 0.0
  %v2613 = vmax.f32 %v2283, 0.0
  %v2614 = vmax.f32 %v2288, 0.0
  %v2615 = vmax.f32 %v2291, 0.0
  %v2616 = vmax.f32 %v2296, 0.0
  %v2617 = vmax.f32 %v2299, 0.0
  %v2618 = vmax.f32 %v2304, 0.0
  %v2619 = vmax.f32 %v2307, 0.0
  %v2620 = vmax.f32 %v2312, 0.0
  %v2621 = vmax.f32 %v2315, 0.0
  %v2622 = vmax.f32 %v2320, 0.0
  %v2623 = vmax.f32 %v2323, 0.0
  %v2624 = vmax.f32 %v2328, 0.0
  %v2625 = vmax.f32 %v2331, 0.0
  %v2626 = vmax.f32 %v2336, 0.0
  %v2627 = vmax.f32 %v2339, 0.0
  %v2628 = vmax.f32 %v2344, 0.0
  %v2629 = vmax.f32 %v2347, 0.0
  %v2630 = vmax.f32 %v2352, 0.0
  %v2631 = vmax.f32 %v2355, 0.0
  %v2632 = vmax.f32 %v2360, 0.0
  %v2633 = vmax.f32 %v2363, 0.0
  %v2634 = vmax.f32 %v2368, 0.0
  %v2635 = vmax.f32 %v2371, 0.0
  %v2636 = vmax.f32 %v2376, 0.0
  %v2637 = vmax.f32 %v2379, 0.0
  %vm2638 = vcmask 261120
  %2639 = vst.msk [vmem:[%s3] sm:$0xff] %vm2638, %v2382
  %2640 = vst.msk [vmem:[%s3 + $0x8] sm:$0xff] %vm2638, %v2383
  %2641 = vst.msk [vmem:[%s3 + $0x10] sm:$0xff] %vm2638, %v2384
  %2642 = vst.msk [vmem:[%s3 + $0x18] sm:$0xff] %vm2638, %v2385
  %2643 = vst.msk [vmem:[%s3 + $0x20] sm:$0xff] %vm2638, %v2386
  %2644 = vst.msk [vmem:[%s3 + $0x28] sm:$0xff] %vm2638, %v2387
  %2645 = vst.msk [vmem:[%s3 + $0x30] sm:$0xff] %vm2638, %v2388
  %2646 = vst.msk [vmem:[%s3 + $0x38] sm:$0xff] %vm2638, %v2389
  %2647 = vst.msk [vmem:[%s3 + $0x40] sm:$0xff] %vm2638, %v2390
  %2648 = vst.msk [vmem:[%s3 + $0x48] sm:$0xff] %vm2638, %v2391
  %2649 = vst.msk [vmem:[%s3 + $0x50] sm:$0xff] %vm2638, %v2392
  %2650 = vst.msk [vmem:[%s3 + $0x58] sm:$0xff] %vm2638, %v2393
  %2651 = vst.msk [vmem:[%s3 + $0x60] sm:$0xff] %vm2638, %v2394
  %2652 = vst.msk [vmem:[%s3 + $0x68] sm:$0xff] %vm2638, %v2395
  %2653 = vst.msk [vmem:[%s3 + $0x70] sm:$0xff] %vm2638, %v2396
  %2654 = vst.msk [vmem:[%s3 + $0x78] sm:$0xff] %vm2638, %v2397
  %2655 = vst.msk [vmem:[%s3 + $0x80] sm:$0xff] %vm2638, %v2398
  %2656 = vst.msk [vmem:[%s3 + $0x88] sm:$0xff] %vm2638, %v2399
  %2657 = vst.msk [vmem:[%s3 + $0x90] sm:$0xff] %vm2638, %v2400
  %2658 = vst.msk [vmem:[%s3 + $0x98] sm:$0xff] %vm2638, %v2401
  %2659 = vst.msk [vmem:[%s3 + $0xa0] sm:$0xff] %vm2638, %v2402
  %2660 = vst.msk [vmem:[%s3 + $0xa8] sm:$0xff] %vm2638, %v2403
  %2661 = vst.msk [vmem:[%s3 + $0xb0] sm:$0xff] %vm2638, %v2404
  %2662 = vst.msk [vmem:[%s3 + $0xb8] sm:$0xff] %vm2638, %v2405
  %2663 = vst.msk [vmem:[%s3 + $0xc0] sm:$0xff] %vm2638, %v2406
  %2664 = vst.msk [vmem:[%s3 + $0xc8] sm:$0xff] %vm2638, %v2407
  %2665 = vst.msk [vmem:[%s3 + $0xd0] sm:$0xff] %vm2638, %v2408
  %2666 = vst.msk [vmem:[%s3 + $0xd8] sm:$0xff] %vm2638, %v2409
  %2667 = vst.msk [vmem:[%s3 + $0xe0] sm:$0xff] %vm2638, %v2410
  %2668 = vst.msk [vmem:[%s3 + $0xe8] sm:$0xff] %vm2638, %v2411
  %2669 = vst.msk [vmem:[%s3 + $0xf0] sm:$0xff] %vm2638, %v2412
  %2670 = vst.msk [vmem:[%s3 + $0xf8] sm:$0xff] %vm2638, %v2413
  %2671 = vst.msk [vmem:[%s3 + $0x100] sm:$0xff] %vm2638, %v2414
  %2672 = vst.msk [vmem:[%s3 + $0x108] sm:$0xff] %vm2638, %v2415
  %2673 = vst.msk [vmem:[%s3 + $0x110] sm:$0xff] %vm2638, %v2416
  %2674 = vst.msk [vmem:[%s3 + $0x118] sm:$0xff] %vm2638, %v2417
  %2675 = vst.msk [vmem:[%s3 + $0x120] sm:$0xff] %vm2638, %v2418
  %2676 = vst.msk [vmem:[%s3 + $0x128] sm:$0xff] %vm2638, %v2419
  %2677 = vst.msk [vmem:[%s3 + $0x130] sm:$0xff] %vm2638, %v2420
  %2678 = vst.msk [vmem:[%s3 + $0x138] sm:$0xff] %vm2638, %v2421
  %2679 = vst.msk [vmem:[%s3 + $0x140] sm:$0xff] %vm2638, %v2422
  %2680 = vst.msk [vmem:[%s3 + $0x148] sm:$0xff] %vm2638, %v2423
  %2681 = vst.msk [vmem:[%s3 + $0x150] sm:$0xff] %vm2638, %v2424
  %2682 = vst.msk [vmem:[%s3 + $0x158] sm:$0xff] %vm2638, %v2425
  %2683 = vst.msk [vmem:[%s3 + $0x160] sm:$0xff] %vm2638, %v2426
  %2684 = vst.msk [vmem:[%s3 + $0x168] sm:$0xff] %vm2638, %v2427
  %2685 = vst.msk [vmem:[%s3 + $0x170] sm:$0xff] %vm2638, %v2428
  %2686 = vst.msk [vmem:[%s3 + $0x178] sm:$0xff] %vm2638, %v2429
  %2687 = vst.msk [vmem:[%s3 + $0x180] sm:$0xff] %vm2638, %v2430
  %2688 = vst.msk [vmem:[%s3 + $0x188] sm:$0xff] %vm2638, %v2431
  %2689 = vst.msk [vmem:[%s3 + $0x190] sm:$0xff] %vm2638, %v2432
  %2690 = vst.msk [vmem:[%s3 + $0x198] sm:$0xff] %vm2638, %v2433
  %2691 = vst.msk [vmem:[%s3 + $0x1a0] sm:$0xff] %vm2638, %v2434
  %2692 = vst.msk [vmem:[%s3 + $0x1a8] sm:$0xff] %vm2638, %v2435
  %2693 = vst.msk [vmem:[%s3 + $0x1b0] sm:$0xff] %vm2638, %v2436
  %2694 = vst.msk [vmem:[%s3 + $0x1b8] sm:$0xff] %vm2638, %v2437
  %2695 = vst.msk [vmem:[%s3 + $0x1c0] sm:$0xff] %vm2638, %v2438
  %2696 = vst.msk [vmem:[%s3 + $0x1c8] sm:$0xff] %vm2638, %v2439
  %2697 = vst.msk [vmem:[%s3 + $0x1d0] sm:$0xff] %vm2638, %v2440
  %2698 = vst.msk [vmem:[%s3 + $0x1d8] sm:$0xff] %vm2638, %v2441
  %2699 = vst.msk [vmem:[%s3 + $0x1e0] sm:$0xff] %vm2638, %v2442
  %2700 = vst.msk [vmem:[%s3 + $0x1e8] sm:$0xff] %vm2638, %v2443
  %2701 = vst.msk [vmem:[%s3 + $0x1f0] sm:$0xff] %vm2638, %v2444
  %2702 = vst.msk [vmem:[%s3 + $0x1f8] sm:$0xff] %vm2638, %v2445
  %2703 = vst.msk [vmem:[%s3 + $0x200] sm:$0xff] %vm2638, %v2446
  %2704 = vst.msk [vmem:[%s3 + $0x208] sm:$0xff] %vm2638, %v2447
  %2705 = vst.msk [vmem:[%s3 + $0x210] sm:$0xff] %vm2638, %v2448
  %2706 = vst.msk [vmem:[%s3 + $0x218] sm:$0xff] %vm2638, %v2449
  %2707 = vst.msk [vmem:[%s3 + $0x220] sm:$0xff] %vm2638, %v2450
  %2708 = vst.msk [vmem:[%s3 + $0x228] sm:$0xff] %vm2638, %v2451
  %2709 = vst.msk [vmem:[%s3 + $0x230] sm:$0xff] %vm2638, %v2452
  %2710 = vst.msk [vmem:[%s3 + $0x238] sm:$0xff] %vm2638, %v2453
  %2711 = vst.msk [vmem:[%s3 + $0x240] sm:$0xff] %vm2638, %v2454
  %2712 = vst.msk [vmem:[%s3 + $0x248] sm:$0xff] %vm2638, %v2455
  %2713 = vst.msk [vmem:[%s3 + $0x250] sm:$0xff] %vm2638, %v2456
  %2714 = vst.msk [vmem:[%s3 + $0x258] sm:$0xff] %vm2638, %v2457
  %2715 = vst.msk [vmem:[%s3 + $0x260] sm:$0xff] %vm2638, %v2458
  %2716 = vst.msk [vmem:[%s3 + $0x268] sm:$0xff] %vm2638, %v2459
  %2717 = vst.msk [vmem:[%s3 + $0x270] sm:$0xff] %vm2638, %v2460
  %2718 = vst.msk [vmem:[%s3 + $0x278] sm:$0xff] %vm2638, %v2461
  %2719 = vst.msk [vmem:[%s3 + $0x280] sm:$0xff] %vm2638, %v2462
  %2720 = vst.msk [vmem:[%s3 + $0x288] sm:$0xff] %vm2638, %v2463
  %2721 = vst.msk [vmem:[%s3 + $0x290] sm:$0xff] %vm2638, %v2464
  %2722 = vst.msk [vmem:[%s3 + $0x298] sm:$0xff] %vm2638, %v2465
  %2723 = vst.msk [vmem:[%s3 + $0x2a0] sm:$0xff] %vm2638, %v2466
  %2724 = vst.msk [vmem:[%s3 + $0x2a8] sm:$0xff] %vm2638, %v2467
  %2725 = vst.msk [vmem:[%s3 + $0x2b0] sm:$0xff] %vm2638, %v2468
  %2726 = vst.msk [vmem:[%s3 + $0x2b8] sm:$0xff] %vm2638, %v2469
  %2727 = vst.msk [vmem:[%s3 + $0x2c0] sm:$0xff] %vm2638, %v2470
  %2728 = vst.msk [vmem:[%s3 + $0x2c8] sm:$0xff] %vm2638, %v2471
  %2729 = vst.msk [vmem:[%s3 + $0x2d0] sm:$0xff] %vm2638, %v2472
  %2730 = vst.msk [vmem:[%s3 + $0x2d8] sm:$0xff] %vm2638, %v2473
  %2731 = vst.msk [vmem:[%s3 + $0x2e0] sm:$0xff] %vm2638, %v2474
  %2732 = vst.msk [vmem:[%s3 + $0x2e8] sm:$0xff] %vm2638, %v2475
  %2733 = vst.msk [vmem:[%s3 + $0x2f0] sm:$0xff] %vm2638, %v2476
  %2734 = vst.msk [vmem:[%s3 + $0x2f8] sm:$0xff] %vm2638, %v2477
  %2735 = vst.msk [vmem:[%s3 + $0x300] sm:$0xff] %vm2638, %v2478
  %2736 = vst.msk [vmem:[%s3 + $0x308] sm:$0xff] %vm2638, %v2479
  %2737 = vst.msk [vmem:[%s3 + $0x310] sm:$0xff] %vm2638, %v2480
  %2738 = vst.msk [vmem:[%s3 + $0x318] sm:$0xff] %vm2638, %v2481
  %2739 = vst.msk [vmem:[%s3 + $0x320] sm:$0xff] %vm2638, %v2482
  %2740 = vst.msk [vmem:[%s3 + $0x328] sm:$0xff] %vm2638, %v2483
  %2741 = vst.msk [vmem:[%s3 + $0x330] sm:$0xff] %vm2638, %v2484
  %2742 = vst.msk [vmem:[%s3 + $0x338] sm:$0xff] %vm2638, %v2485
  %2743 = vst.msk [vmem:[%s3 + $0x340] sm:$0xff] %vm2638, %v2486
  %2744 = vst.msk [vmem:[%s3 + $0x348] sm:$0xff] %vm2638, %v2487
  %2745 = vst.msk [vmem:[%s3 + $0x350] sm:$0xff] %vm2638, %v2488
  %2746 = vst.msk [vmem:[%s3 + $0x358] sm:$0xff] %vm2638, %v2489
  %2747 = vst.msk [vmem:[%s3 + $0x360] sm:$0xff] %vm2638, %v2490
  %2748 = vst.msk [vmem:[%s3 + $0x368] sm:$0xff] %vm2638, %v2491
  %2749 = vst.msk [vmem:[%s3 + $0x370] sm:$0xff] %vm2638, %v2492
  %2750 = vst.msk [vmem:[%s3 + $0x378] sm:$0xff] %vm2638, %v2493
  %2751 = vst.msk [vmem:[%s3 + $0x380] sm:$0xff] %vm2638, %v2494
  %2752 = vst.msk [vmem:[%s3 + $0x388] sm:$0xff] %vm2638, %v2495
  %2753 = vst.msk [vmem:[%s3 + $0x390] sm:$0xff] %vm2638, %v2496
  %2754 = vst.msk [vmem:[%s3 + $0x398] sm:$0xff] %vm2638, %v2497
  %2755 = vst.msk [vmem:[%s3 + $0x3a0] sm:$0xff] %vm2638, %v2498
  %2756 = vst.msk [vmem:[%s3 + $0x3a8] sm:$0xff] %vm2638, %v2499
  %2757 = vst.msk [vmem:[%s3 + $0x3b0] sm:$0xff] %vm2638, %v2500
  %2758 = vst.msk [vmem:[%s3 + $0x3b8] sm:$0xff] %vm2638, %v2501
  %2759 = vst.msk [vmem:[%s3 + $0x3c0] sm:$0xff] %vm2638, %v2502
  %2760 = vst.msk [vmem:[%s3 + $0x3c8] sm:$0xff] %vm2638, %v2503
  %2761 = vst.msk [vmem:[%s3 + $0x3d0] sm:$0xff] %vm2638, %v2504
  %2762 = vst.msk [vmem:[%s3 + $0x3d8] sm:$0xff] %vm2638, %v2505
  %2763 = vst.msk [vmem:[%s3 + $0x3e0] sm:$0xff] %vm2638, %v2506
  %2764 = vst.msk [vmem:[%s3 + $0x3e8] sm:$0xff] %vm2638, %v2507
  %2765 = vst.msk [vmem:[%s3 + $0x3f0] sm:$0xff] %vm2638, %v2508
  %2766 = vst.msk [vmem:[%s3 + $0x3f8] sm:$0xff] %vm2638, %v2509
  %2767 = vst.msk [vmem:[%s3 + $0x400] sm:$0xff] %vm2638, %v2510
  %2768 = vst.msk [vmem:[%s3 + $0x408] sm:$0xff] %vm2638, %v2511
  %2769 = vst.msk [vmem:[%s3 + $0x410] sm:$0xff] %vm2638, %v2512
  %2770 = vst.msk [vmem:[%s3 + $0x418] sm:$0xff] %vm2638, %v2513
  %2771 = vst.msk [vmem:[%s3 + $0x420] sm:$0xff] %vm2638, %v2514
  %2772 = vst.msk [vmem:[%s3 + $0x428] sm:$0xff] %vm2638, %v2515
  %2773 = vst.msk [vmem:[%s3 + $0x430] sm:$0xff] %vm2638, %v2516
  %2774 = vst.msk [vmem:[%s3 + $0x438] sm:$0xff] %vm2638, %v2517
  %2775 = vst.msk [vmem:[%s3 + $0x440] sm:$0xff] %vm2638, %v2518
  %2776 = vst.msk [vmem:[%s3 + $0x448] sm:$0xff] %vm2638, %v2519
  %2777 = vst.msk [vmem:[%s3 + $0x450] sm:$0xff] %vm2638, %v2520
  %2778 = vst.msk [vmem:[%s3 + $0x458] sm:$0xff] %vm2638, %v2521
  %2779 = vst.msk [vmem:[%s3 + $0x460] sm:$0xff] %vm2638, %v2522
  %2780 = vst.msk [vmem:[%s3 + $0x468] sm:$0xff] %vm2638, %v2523
  %2781 = vst.msk [vmem:[%s3 + $0x470] sm:$0xff] %vm2638, %v2524
  %2782 = vst.msk [vmem:[%s3 + $0x478] sm:$0xff] %vm2638, %v2525
  %2783 = vst.msk [vmem:[%s3 + $0x480] sm:$0xff] %vm2638, %v2526
  %2784 = vst.msk [vmem:[%s3 + $0x488] sm:$0xff] %vm2638, %v2527
  %2785 = vst.msk [vmem:[%s3 + $0x490] sm:$0xff] %vm2638, %v2528
  %2786 = vst.msk [vmem:[%s3 + $0x498] sm:$0xff] %vm2638, %v2529
  %2787 = vst.msk [vmem:[%s3 + $0x4a0] sm:$0xff] %vm2638, %v2530
  %2788 = vst.msk [vmem:[%s3 + $0x4a8] sm:$0xff] %vm2638, %v2531
  %2789 = vst.msk [vmem:[%s3 + $0x4b0] sm:$0xff] %vm2638, %v2532
  %2790 = vst.msk [vmem:[%s3 + $0x4b8] sm:$0xff] %vm2638, %v2533
  %2791 = vst.msk [vmem:[%s3 + $0x4c0] sm:$0xff] %vm2638, %v2534
  %2792 = vst.msk [vmem:[%s3 + $0x4c8] sm:$0xff] %vm2638, %v2535
  %2793 = vst.msk [vmem:[%s3 + $0x4d0] sm:$0xff] %vm2638, %v2536
  %2794 = vst.msk [vmem:[%s3 + $0x4d8] sm:$0xff] %vm2638, %v2537
  %2795 = vst.msk [vmem:[%s3 + $0x4e0] sm:$0xff] %vm2638, %v2538
  %2796 = vst.msk [vmem:[%s3 + $0x4e8] sm:$0xff] %vm2638, %v2539
  %2797 = vst.msk [vmem:[%s3 + $0x4f0] sm:$0xff] %vm2638, %v2540
  %2798 = vst.msk [vmem:[%s3 + $0x4f8] sm:$0xff] %vm2638, %v2541
  %2799 = vst.msk [vmem:[%s3 + $0x500] sm:$0xff] %vm2638, %v2542
  %2800 = vst.msk [vmem:[%s3 + $0x508] sm:$0xff] %vm2638, %v2543
  %2801 = vst.msk [vmem:[%s3 + $0x510] sm:$0xff] %vm2638, %v2544
  %2802 = vst.msk [vmem:[%s3 + $0x518] sm:$0xff] %vm2638, %v2545
  %2803 = vst.msk [vmem:[%s3 + $0x520] sm:$0xff] %vm2638, %v2546
  %2804 = vst.msk [vmem:[%s3 + $0x528] sm:$0xff] %vm2638, %v2547
  %2805 = vst.msk [vmem:[%s3 + $0x530] sm:$0xff] %vm2638, %v2548
  %2806 = vst.msk [vmem:[%s3 + $0x538] sm:$0xff] %vm2638, %v2549
  %2807 = vst.msk [vmem:[%s3 + $0x540] sm:$0xff] %vm2638, %v2550
  %2808 = vst.msk [vmem:[%s3 + $0x548] sm:$0xff] %vm2638, %v2551
  %2809 = vst.msk [vmem:[%s3 + $0x550] sm:$0xff] %vm2638, %v2552
  %2810 = vst.msk [vmem:[%s3 + $0x558] sm:$0xff] %vm2638, %v2553
  %2811 = vst.msk [vmem:[%s3 + $0x560] sm:$0xff] %vm2638, %v2554
  %2812 = vst.msk [vmem:[%s3 + $0x568] sm:$0xff] %vm2638, %v2555
  %2813 = vst.msk [vmem:[%s3 + $0x570] sm:$0xff] %vm2638, %v2556
  %2814 = vst.msk [vmem:[%s3 + $0x578] sm:$0xff] %vm2638, %v2557
  %2815 = vst.msk [vmem:[%s3 + $0x580] sm:$0xff] %vm2638, %v2558
  %2816 = vst.msk [vmem:[%s3 + $0x588] sm:$0xff] %vm2638, %v2559
  %2817 = vst.msk [vmem:[%s3 + $0x590] sm:$0xff] %vm2638, %v2560
  %2818 = vst.msk [vmem:[%s3 + $0x598] sm:$0xff] %vm2638, %v2561
  %2819 = vst.msk [vmem:[%s3 + $0x5a0] sm:$0xff] %vm2638, %v2562
  %2820 = vst.msk [vmem:[%s3 + $0x5a8] sm:$0xff] %vm2638, %v2563
  %2821 = vst.msk [vmem:[%s3 + $0x5b0] sm:$0xff] %vm2638, %v2564
  %2822 = vst.msk [vmem:[%s3 + $0x5b8] sm:$0xff] %vm2638, %v2565
  %2823 = vst.msk [vmem:[%s3 + $0x5c0] sm:$0xff] %vm2638, %v2566
  %2824 = vst.msk [vmem:[%s3 + $0x5c8] sm:$0xff] %vm2638, %v2567
  %2825 = vst.msk [vmem:[%s3 + $0x5d0] sm:$0xff] %vm2638, %v2568
  %2826 = vst.msk [vmem:[%s3 + $0x5d8] sm:$0xff] %vm2638, %v2569
  %2827 = vst.msk [vmem:[%s3 + $0x5e0] sm:$0xff] %vm2638, %v2570
  %2828 = vst.msk [vmem:[%s3 + $0x5e8] sm:$0xff] %vm2638, %v2571
  %2829 = vst.msk [vmem:[%s3 + $0x5f0] sm:$0xff] %vm2638, %v2572
  %2830 = vst.msk [vmem:[%s3 + $0x5f8] sm:$0xff] %vm2638, %v2573
  %2831 = vst.msk [vmem:[%s3 + $0x600] sm:$0xff] %vm2638, %v2574
  %2832 = vst.msk [vmem:[%s3 + $0x608] sm:$0xff] %vm2638, %v2575
  %2833 = vst.msk [vmem:[%s3 + $0x610] sm:$0xff] %vm2638, %v2576
  %2834 = vst.msk [vmem:[%s3 + $0x618] sm:$0xff] %vm2638, %v2577
  %2835 = vst.msk [vmem:[%s3 + $0x620] sm:$0xff] %vm2638, %v2578
  %2836 = vst.msk [vmem:[%s3 + $0x628] sm:$0xff] %vm2638, %v2579
  %2837 = vst.msk [vmem:[%s3 + $0x630] sm:$0xff] %vm2638, %v2580
  %2838 = vst.msk [vmem:[%s3 + $0x638] sm:$0xff] %vm2638, %v2581
  %2839 = vst.msk [vmem:[%s3 + $0x640] sm:$0xff] %vm2638, %v2582
  %2840 = vst.msk [vmem:[%s3 + $0x648] sm:$0xff] %vm2638, %v2583
  %2841 = vst.msk [vmem:[%s3 + $0x650] sm:$0xff] %vm2638, %v2584
  %2842 = vst.msk [vmem:[%s3 + $0x658] sm:$0xff] %vm2638, %v2585
  %2843 = vst.msk [vmem:[%s3 + $0x660] sm:$0xff] %vm2638, %v2586
  %2844 = vst.msk [vmem:[%s3 + $0x668] sm:$0xff] %vm2638, %v2587
  %2845 = vst.msk [vmem:[%s3 + $0x670] sm:$0xff] %vm2638, %v2588
  %2846 = vst.msk [vmem:[%s3 + $0x678] sm:$0xff] %vm2638, %v2589
  %2847 = vst.msk [vmem:[%s3 + $0x680] sm:$0xff] %vm2638, %v2590
  %2848 = vst.msk [vmem:[%s3 + $0x688] sm:$0xff] %vm2638, %v2591
  %2849 = vst.msk [vmem:[%s3 + $0x690] sm:$0xff] %vm2638, %v2592
  %2850 = vst.msk [vmem:[%s3 + $0x698] sm:$0xff] %vm2638, %v2593
  %2851 = vst.msk [vmem:[%s3 + $0x6a0] sm:$0xff] %vm2638, %v2594
  %2852 = vst.msk [vmem:[%s3 + $0x6a8] sm:$0xff] %vm2638, %v2595
  %2853 = vst.msk [vmem:[%s3 + $0x6b0] sm:$0xff] %vm2638, %v2596
  %2854 = vst.msk [vmem:[%s3 + $0x6b8] sm:$0xff] %vm2638, %v2597
  %2855 = vst.msk [vmem:[%s3 + $0x6c0] sm:$0xff] %vm2638, %v2598
  %2856 = vst.msk [vmem:[%s3 + $0x6c8] sm:$0xff] %vm2638, %v2599
  %2857 = vst.msk [vmem:[%s3 + $0x6d0] sm:$0xff] %vm2638, %v2600
  %2858 = vst.msk [vmem:[%s3 + $0x6d8] sm:$0xff] %vm2638, %v2601
  %2859 = vst.msk [vmem:[%s3 + $0x6e0] sm:$0xff] %vm2638, %v2602
  %2860 = vst.msk [vmem:[%s3 + $0x6e8] sm:$0xff] %vm2638, %v2603
  %2861 = vst.msk [vmem:[%s3 + $0x6f0] sm:$0xff] %vm2638, %v2604
  %2862 = vst.msk [vmem:[%s3 + $0x6f8] sm:$0xff] %vm2638, %v2605
  %2863 = vst.msk [vmem:[%s3 + $0x700] sm:$0xff] %vm2638, %v2606
  %2864 = vst.msk [vmem:[%s3 + $0x708] sm:$0xff] %vm2638, %v2607
  %2865 = vst.msk [vmem:[%s3 + $0x710] sm:$0xff] %vm2638, %v2608
  %2866 = vst.msk [vmem:[%s3 + $0x718] sm:$0xff] %vm2638, %v2609
  %2867 = vst.msk [vmem:[%s3 + $0x720] sm:$0xff] %vm2638, %v2610
  %2868 = vst.msk [vmem:[%s3 + $0x728] sm:$0xff] %vm2638, %v2611
  %2869 = vst.msk [vmem:[%s3 + $0x730] sm:$0xff] %vm2638, %v2612
  %2870 = vst.msk [vmem:[%s3 + $0x738] sm:$0xff] %vm2638, %v2613
  %2871 = vst.msk [vmem:[%s3 + $0x740] sm:$0xff] %vm2638, %v2614
  %2872 = vst.msk [vmem:[%s3 + $0x748] sm:$0xff] %vm2638, %v2615
  %2873 = vst.msk [vmem:[%s3 + $0x750] sm:$0xff] %vm2638, %v2616
  %2874 = vst.msk [vmem:[%s3 + $0x758] sm:$0xff] %vm2638, %v2617
  %2875 = vst.msk [vmem:[%s3 + $0x760] sm:$0xff] %vm2638, %v2618
  %2876 = vst.msk [vmem:[%s3 + $0x768] sm:$0xff] %vm2638, %v2619
  %2877 = vst.msk [vmem:[%s3 + $0x770] sm:$0xff] %vm2638, %v2620
  %2878 = vst.msk [vmem:[%s3 + $0x778] sm:$0xff] %vm2638, %v2621
  %2879 = vst.msk [vmem:[%s3 + $0x780] sm:$0xff] %vm2638, %v2622
  %2880 = vst.msk [vmem:[%s3 + $0x788] sm:$0xff] %vm2638, %v2623
  %2881 = vst.msk [vmem:[%s3 + $0x790] sm:$0xff] %vm2638, %v2624
  %2882 = vst.msk [vmem:[%s3 + $0x798] sm:$0xff] %vm2638, %v2625
  %2883 = vst.msk [vmem:[%s3 + $0x7a0] sm:$0xff] %vm2638, %v2626
  %2884 = vst.msk [vmem:[%s3 + $0x7a8] sm:$0xff] %vm2638, %v2627
  %2885 = vst.msk [vmem:[%s3 + $0x7b0] sm:$0xff] %vm2638, %v2628
  %2886 = vst.msk [vmem:[%s3 + $0x7b8] sm:$0xff] %vm2638, %v2629
  %2887 = vst.msk [vmem:[%s3 + $0x7c0] sm:$0xff] %vm2638, %v2630
  %2888 = vst.msk [vmem:[%s3 + $0x7c8] sm:$0xff] %vm2638, %v2631
  %2889 = vst.msk [vmem:[%s3 + $0x7d0] sm:$0xff] %vm2638, %v2632
  %2890 = vst.msk [vmem:[%s3 + $0x7d8] sm:$0xff] %vm2638, %v2633
  %2891 = vst.msk [vmem:[%s3 + $0x7e0] sm:$0xff] %vm2638, %v2634
  %2892 = vst.msk [vmem:[%s3 + $0x7e8] sm:$0xff] %vm2638, %v2635
  %2893 = vst.msk [vmem:[%s3 + $0x7f0] sm:$0xff] %vm2638, %v2636
  %2894 = vst.msk [vmem:[%s3 + $0x7f8] sm:$0xff] %vm2638, %v2637
  // Predicated region
  $region14: #{tpu_custom_call.1} parent=0 // pred_check
    _
  $region15: #{tpu_custom_call.1} parent=0 // pred_check_branch
    %2896 = sbr.rel (0) target = $region17
  $region16: #{tpu_custom_call.1} parent=0 // pred_region
    _
  $region17: #{tpu_custom_call.1} parent=0 // pred_fallthru
    _
  // Predicated region
  $region18: #{tpu_custom_call.1} parent=0 // pred_check
    _
  $region19: #{tpu_custom_call.1} parent=0 // pred_check_branch
    %2898 = sbr.rel (0) target = $region21
  $region20: #{tpu_custom_call.1} parent=0 // pred_region
    _
  $region21: #{tpu_custom_call.1} parent=0 // pred_fallthru
    _

</llo_original>
